<compile_context>
chip_gen: v6e
topology: v6e:2x2x1
jax: 0.10.0
libtpu: 0.0.40
codegen_flags: <defaults>
</compile_context>

<pallas_src>
import functools

import jax
import jax.numpy as jnp
from jax import lax
from jax.experimental import pallas as pl
from jax.experimental.pallas import tpu as pltpu


def _residual_conv_block_kernel(Nb, H, WC,
                                x_ref, wb1_ref, b1_ref, wb2_ref, b2_ref,
                                o_ref, pad_ref):
    """One grid step = Nb images, lane-dense (H, W*C) layout.

    x_ref:   (Nb, H, W*C)     f32   input block (also the identity branch)
    wb*_ref: (3, W*C, W*C)    bf16  per-dy band weights (res_scale folded in wb2)
    b*_ref:  (1, W*C)         f32   lane-tiled biases (res_scale folded in b2)
    o_ref:   (Nb, H, W*C)     f32   output block
    pad_ref: (Nb, H+2, W*C)   bf16  scratch; rows 0 and H+1 are the zero halo
    """
    # Zero only the 2 halo rows per image; the interior is fully overwritten
    # below.  Re-done every step so the "parallel" batch axis can be split
    # across TensorCores (each core owns its own scratch).
    zrow = jnp.zeros((Nb, 1, WC), jnp.bfloat16)
    pad_ref[:, 0:1, :] = zrow
    pad_ref[:, H + 1:H + 2, :] = zrow

    x = x_ref[...]                                   # (Nb, H, W*C) f32; residual
    pad_ref[:, 1:H + 1, :] = x.astype(jnp.bfloat16)  # stage conv1 input (bf16)

    def conv3x3(wb_ref, b_ref):
        # 3x3 SAME conv as 3 row-shifted matmuls against (W*C, W*C) band
        # weights.  dx shift + zero padding in W live inside the band matrix;
        # zero padding in H comes from the halo rows of pad_ref.
        def tap(dy):
            lhs = pad_ref[:, dy:dy + H, :].reshape(Nb * H, WC)   # bf16
            return jnp.dot(lhs, wb_ref[dy],
                           preferred_element_type=jnp.float32)
        acc = tap(0) + tap(1) + tap(2)               # f32 accumulation
        return acc + b_ref[...]                      # bias broadcast from (1, W*C)

    act = jnp.maximum(conv3x3(wb1_ref, b1_ref), 0.0)             # relu(conv1(x))
    pad_ref[:, 1:H + 1, :] = act.reshape(Nb, H, WC).astype(jnp.bfloat16)
    out = conv3x3(wb2_ref, b2_ref).reshape(Nb, H, WC)            # conv2 (pre-scaled)

    o_ref[...] = x + out                             # residual add (f32, lane-dense)


def _band_weights(w_hwio, W):
    """(3, 3, C, C) HWIO conv weights -> (3, W*C, W*C) per-dy band matrices.

    band[dy][w_in*C + ci, w_out*C + co] = w[dy, w_in - w_out + 1, ci, co]
    for |w_in - w_out| <= 1 (zero elsewhere), so that
        out[h, :] = sum_dy  x_pad_row[h + dy] @ band[dy]
    implements the 3x3 SAME conv, with zero padding along W handled implicitly.
    """
    bands = []
    for dy in range(3):
        b = jnp.kron(jnp.eye(W, k=1, dtype=w_hwio.dtype), w_hwio[dy, 0])
        b = b + jnp.kron(jnp.eye(W, k=0, dtype=w_hwio.dtype), w_hwio[dy, 1])
        b = b + jnp.kron(jnp.eye(W, k=-1, dtype=w_hwio.dtype), w_hwio[dy, 2])
        bands.append(b)
    return jnp.stack(bands)


def residual_conv_block_nhwc(x_nhwc, w1, b1, w2, b2, res_scale=1.0):
    """ResidualConvBlock.forward on NHWC activations (preferred TPU layout)."""
    x = x_nhwc.astype(jnp.float32)
    N, H, W, C = x.shape
    WC = W * C
    x2 = x.reshape(N, H, WC)                         # pure reshape -> lane-dense

    # Trace-time weight prep: band matrices in f32, res_scale folded into
    # conv2, then cast once to bf16 (MXU operands).  Biases lane-tiled.
    rs = jnp.float32(res_scale)
    wb1 = _band_weights(w1.astype(jnp.float32), W).astype(jnp.bfloat16)
    wb2 = _band_weights(w2.astype(jnp.float32) * rs, W).astype(jnp.bfloat16)
    b1t = jnp.tile(b1.astype(jnp.float32), W).reshape(1, WC)
    b2t = jnp.tile(b2.astype(jnp.float32) * rs, W).reshape(1, WC)

    # Per-chip VMEM budget (don't cap 128 MiB parts at 64 MiB).
    try:
        vmem_phys = int(pltpu.get_tpu_info().vmem_capacity_bytes)
    except Exception:
        vmem_phys = 64 * 1024 * 1024                 # safe floor (v7x per-TC)
    budget = (vmem_phys * 3) // 4

    weight_bytes = 2 * 3 * WC * WC * 2 + 2 * WC * 4
    per_img = 2 * 2 * H * WC * 4 + (H + 2) * WC * 2  # dbl-buffered in/out + scratch

    # Images per grid step: largest divisor of N that fits the budget, while
    # keeping >= 2 grid steps when possible (v7x has 2 TensorCores).
    divisors = [d for d in range(1, N + 1) if N % d == 0]
    feasible = [d for d in divisors if weight_bytes + d * per_img <= budget] or [1]
    keep_two = [d for d in feasible if N // d >= 2]
    Nb = max(keep_two) if keep_two else max(feasible)

    need = weight_bytes + Nb * per_img
    vmem_limit = int(min(budget, max(2 * need, 32 * 1024 * 1024)))

    kernel = functools.partial(_residual_conv_block_kernel, Nb, H, WC)

    out = pl.pallas_call(
        kernel,
        out_shape=jax.ShapeDtypeStruct((N, H, WC), jnp.float32),
        grid_spec=pltpu.PrefetchScalarGridSpec(
            num_scalar_prefetch=0,
            grid=(N // Nb,),
            in_specs=[
                pl.BlockSpec((Nb, H, WC), lambda n: (n, 0, 0)),
                pl.BlockSpec((3, WC, WC), lambda n: (0, 0, 0)),
                pl.BlockSpec((1, WC), lambda n: (0, 0)),
                pl.BlockSpec((3, WC, WC), lambda n: (0, 0, 0)),
                pl.BlockSpec((1, WC), lambda n: (0, 0)),
            ],
            out_specs=pl.BlockSpec((Nb, H, WC), lambda n: (n, 0, 0)),
            scratch_shapes=[pltpu.VMEM((Nb, H + 2, WC), jnp.bfloat16)],
        ),
        compiler_params=pltpu.CompilerParams(
            dimension_semantics=("parallel",),
            vmem_limit_bytes=vmem_limit),
    )(x2, wb1, b1t, wb2, b2t)

    return out.reshape(N, H, W, C)


def residual_conv_block(x_nchw, w1, b1, w2, b2, res_scale=1.0):
    """NCHW wrapper matching the PyTorch module's layout.

    In a full model, keep activations in NHWC (or (N, H, W*C)) between blocks
    and call residual_conv_block_nhwc directly — the two transposes below are
    whole extra HBM passes that only exist to match the NCHW interface.
    """
    x = jnp.transpose(x_nchw, (0, 2, 3, 1))          # NCHW -> NHWC
    out = residual_conv_block_nhwc(x, w1, b1, w2, b2, res_scale)
    return jnp.transpose(out, (0, 3, 1, 2))          # NHWC -> NCHW


def _reference(x_nchw, w1, b1, w2, b2, res_scale=1.0):
    """Pure-JAX f32 reference mirroring the PyTorch forward."""
    x = jnp.transpose(x_nchw, (0, 2, 3, 1)).astype(jnp.float32)
    dn = ('NHWC', 'HWIO', 'NHWC')
    c1 = lax.conv_general_dilated(x, w1, (1, 1), 'SAME', dimension_numbers=dn)
    c1 = jnp.maximum(c1 + b1[None, None, None, :], 0.0)
    c2 = lax.conv_general_dilated(c1, w2, (1, 1), 'SAME', dimension_numbers=dn)
    c2 = c2 + b2[None, None, None, :]
    out = x + c2 * res_scale
    return jnp.transpose(out, (0, 3, 1, 2))


if __name__ == "__main__":
    # Small shapes consistent with the module (num_feat channels, NCHW input).
    N, C, H, W = 2, 16, 16, 16
    res_scale = 0.5                                  # exercises the fold path

    key = jax.random.PRNGKey(0)
    kx, kw1, kb1, kw2, kb2 = jax.random.split(key, 5)

    x = jax.random.normal(kx, (N, C, H, W), jnp.float32)           # NCHW input
    w1 = 0.1 * jax.random.normal(kw1, (3, 3, C, C), jnp.float32)   # HWIO
    b1 = 0.1 * jax.random.normal(kb1, (C,), jnp.float32)
    w2 = 0.1 * jax.random.normal(kw2, (3, 3, C, C), jnp.float32)
    b2 = 0.1 * jax.random.normal(kb2, (C,), jnp.float32)

    out = jax.block_until_ready(
        residual_conv_block(x, w1, b1, w2, b2, res_scale=res_scale))
    ref = jax.block_until_ready(
        _reference(x, w1, b1, w2, b2, res_scale=res_scale))

    assert out.shape == (N, C, H, W)
    # bf16 matmul operands (f32 accumulation) -> slightly looser tolerance
    # than the pure-f32 reference.
    assert jnp.allclose(out, ref, rtol=2e-2, atol=2e-2), \
        "Pallas output mismatch vs reference"

    print("KERNEL_OK")
</pallas_src>

<mosaic_0001>
module attributes {stable_mosaic.version = 11 : i64} {
  func.func @_residual_conv_block_kernel(%arg0: i32, %arg1: memref<1x16x256xf32, #tpu.memory_space<vmem>>, %arg2: memref<3x256x256xbf16, #tpu.memory_space<vmem>>, %arg3: memref<1x256xf32, #tpu.memory_space<vmem>>, %arg4: memref<3x256x256xbf16, #tpu.memory_space<vmem>>, %arg5: memref<1x256xf32, #tpu.memory_space<vmem>>, %arg6: memref<1x16x256xf32, #tpu.memory_space<vmem>>, %arg7: memref<1x18x256xbf16, #tpu.memory_space<vmem>>) attributes {dimension_semantics = [#tpu.dimension_semantics<parallel>], iteration_bounds = array<i64: 2>, scalar_prefetch = 0 : i64, scratch_operands = 1 : i64, tpu.core_type = #tpu.core_type<tc>, window_params = [{transform_indices = @transform_0, window_bounds = array<i64: 1, 16, 256>}, {pipeline_mode = #tpu.pipeline_mode<synchronous>, transform_indices = @transform_1, window_bounds = array<i64: 3, 256, 256>}, {pipeline_mode = #tpu.pipeline_mode<synchronous>, transform_indices = @transform_2, window_bounds = array<i64: 1, 256>}, {pipeline_mode = #tpu.pipeline_mode<synchronous>, transform_indices = @transform_3, window_bounds = array<i64: 3, 256, 256>}, {pipeline_mode = #tpu.pipeline_mode<synchronous>, transform_indices = @transform_4, window_bounds = array<i64: 1, 256>}, {transform_indices = @transform_5, window_bounds = array<i64: 1, 16, 256>}]} {
    %cst = arith.constant 0.000000e+00 : bf16
    %0 = vector.broadcast %cst : bf16 to vector<1x1x256xbf16>
    %c0 = arith.constant 0 : index
    %c0_0 = arith.constant 0 : index
    %c0_1 = arith.constant 0 : index
    %1 = vector.load %arg7[%c0, %c0_0, %c0_1] : memref<1x18x256xbf16, #tpu.memory_space<vmem>>, vector<1x1x256xbf16>
    tpu.vector_store %arg7[%c0, %c0_0, %c0_1], %0 {strides = array<i32>} : memref<1x18x256xbf16, #tpu.memory_space<vmem>>, vector<1x1x256xbf16>,
    %c0_2 = arith.constant 0 : index
    %c17 = arith.constant 17 : index
    %c0_3 = arith.constant 0 : index
    %2 = vector.load %arg7[%c0_2, %c17, %c0_3] : memref<1x18x256xbf16, #tpu.memory_space<vmem>>, vector<1x1x256xbf16>
    tpu.vector_store %arg7[%c0_2, %c17, %c0_3], %0 {strides = array<i32>} : memref<1x18x256xbf16, #tpu.memory_space<vmem>>, vector<1x1x256xbf16>,
    %c0_4 = arith.constant 0 : index
    %c0_5 = arith.constant 0 : index
    %c0_6 = arith.constant 0 : index
    %3 = vector.load %arg1[%c0_4, %c0_5, %c0_6] : memref<1x16x256xf32, #tpu.memory_space<vmem>>, vector<1x16x256xf32>
    %4 = arith.truncf %3 : vector<1x16x256xf32> to vector<1x16x256xbf16>
    %c0_7 = arith.constant 0 : index
    %c1 = arith.constant 1 : index
    %c0_8 = arith.constant 0 : index
    %5 = vector.load %arg7[%c0_7, %c1, %c0_8] : memref<1x18x256xbf16, #tpu.memory_space<vmem>>, vector<1x16x256xbf16>
    tpu.vector_store %arg7[%c0_7, %c1, %c0_8], %4 {strides = array<i32>} : memref<1x18x256xbf16, #tpu.memory_space<vmem>>, vector<1x16x256xbf16>,
    %c0_9 = arith.constant 0 : index
    %c0_10 = arith.constant 0 : index
    %c0_11 = arith.constant 0 : index
    %6 = vector.load %arg7[%c0_9, %c0_10, %c0_11] : memref<1x18x256xbf16, #tpu.memory_space<vmem>>, vector<1x16x256xbf16>
    %7 = vector.shape_cast %6 : vector<1x16x256xbf16> to vector<16x256xbf16>
    %c0_12 = arith.constant 0 : index
    %c0_13 = arith.constant 0 : index
    %c0_14 = arith.constant 0 : index
    %8 = vector.load %arg2[%c0_12, %c0_13, %c0_14] : memref<3x256x256xbf16, #tpu.memory_space<vmem>>, vector<1x256x256xbf16>
    %9 = vector.shape_cast %8 : vector<1x256x256xbf16> to vector<256x256xbf16>
    %cst_15 = arith.constant dense<0.000000e+00> : vector<16x256xf32>
    %10 = tpu.matmul %7, %9, %cst_15 {dimension_numbers = #tpu.dot_dimension_numbers<[1], [0], [0], [1], [0, 0, 1, 1], [], []>} : vector<16x256xbf16>, vector<256x256xbf16>, vector<16x256xf32> -> vector<16x256xf32>
    %c0_16 = arith.constant 0 : index
    %c1_17 = arith.constant 1 : index
    %c0_18 = arith.constant 0 : index
    %11 = vector.load %arg7[%c0_16, %c1_17, %c0_18] : memref<1x18x256xbf16, #tpu.memory_space<vmem>>, vector<1x16x256xbf16>
    %12 = vector.shape_cast %11 : vector<1x16x256xbf16> to vector<16x256xbf16>
    %c1_19 = arith.constant 1 : index
    %c0_20 = arith.constant 0 : index
    %c0_21 = arith.constant 0 : index
    %13 = vector.load %arg2[%c1_19, %c0_20, %c0_21] : memref<3x256x256xbf16, #tpu.memory_space<vmem>>, vector<1x256x256xbf16>
    %14 = vector.shape_cast %13 : vector<1x256x256xbf16> to vector<256x256xbf16>
    %cst_22 = arith.constant dense<0.000000e+00> : vector<16x256xf32>
    %15 = tpu.matmul %12, %14, %cst_22 {dimension_numbers = #tpu.dot_dimension_numbers<[1], [0], [0], [1], [0, 0, 1, 1], [], []>} : vector<16x256xbf16>, vector<256x256xbf16>, vector<16x256xf32> -> vector<16x256xf32>
    %16 = arith.addf %10, %15 : vector<16x256xf32>
    %c0_23 = arith.constant 0 : index
    %c2 = arith.constant 2 : index
    %c0_24 = arith.constant 0 : index
    %17 = vector.load %arg7[%c0_23, %c2, %c0_24] : memref<1x18x256xbf16, #tpu.memory_space<vmem>>, vector<1x16x256xbf16>
    %18 = vector.shape_cast %17 : vector<1x16x256xbf16> to vector<16x256xbf16>
    %c2_25 = arith.constant 2 : index
    %c0_26 = arith.constant 0 : index
    %c0_27 = arith.constant 0 : index
    %19 = vector.load %arg2[%c2_25, %c0_26, %c0_27] : memref<3x256x256xbf16, #tpu.memory_space<vmem>>, vector<1x256x256xbf16>
    %20 = vector.shape_cast %19 : vector<1x256x256xbf16> to vector<256x256xbf16>
    %cst_28 = arith.constant dense<0.000000e+00> : vector<16x256xf32>
    %21 = tpu.matmul %18, %20, %cst_28 {dimension_numbers = #tpu.dot_dimension_numbers<[1], [0], [0], [1], [0, 0, 1, 1], [], []>} : vector<16x256xbf16>, vector<256x256xbf16>, vector<16x256xf32> -> vector<16x256xf32>
    %22 = arith.addf %16, %21 : vector<16x256xf32>
    %c0_29 = arith.constant 0 : index
    %c0_30 = arith.constant 0 : index
    %23 = vector.load %arg3[%c0_29, %c0_30] : memref<1x256xf32, #tpu.memory_space<vmem>>, vector<1x256xf32>
    %24 = vector.broadcast %23 : vector<1x256xf32> to vector<16x256xf32>
    %25 = arith.addf %22, %24 : vector<16x256xf32>
    %cst_31 = arith.constant 0.000000e+00 : f32
    %26 = vector.broadcast %cst_31 : f32 to vector<16x256xf32>
    %27 = arith.maximumf %25, %26 : vector<16x256xf32>
    %28 = vector.shape_cast %27 : vector<16x256xf32> to vector<1x16x256xf32>
    %29 = arith.truncf %28 : vector<1x16x256xf32> to vector<1x16x256xbf16>
    %c0_32 = arith.constant 0 : index
    %c1_33 = arith.constant 1 : index
    %c0_34 = arith.constant 0 : index
    %30 = vector.load %arg7[%c0_32, %c1_33, %c0_34] : memref<1x18x256xbf16, #tpu.memory_space<vmem>>, vector<1x16x256xbf16>
    tpu.vector_store %arg7[%c0_32, %c1_33, %c0_34], %29 {strides = array<i32>} : memref<1x18x256xbf16, #tpu.memory_space<vmem>>, vector<1x16x256xbf16>,
    %c0_35 = arith.constant 0 : index
    %c0_36 = arith.constant 0 : index
    %c0_37 = arith.constant 0 : index
    %31 = vector.load %arg7[%c0_35, %c0_36, %c0_37] : memref<1x18x256xbf16, #tpu.memory_space<vmem>>, vector<1x16x256xbf16>
    %32 = vector.shape_cast %31 : vector<1x16x256xbf16> to vector<16x256xbf16>
    %c0_38 = arith.constant 0 : index
    %c0_39 = arith.constant 0 : index
    %c0_40 = arith.constant 0 : index
    %33 = vector.load %arg4[%c0_38, %c0_39, %c0_40] : memref<3x256x256xbf16, #tpu.memory_space<vmem>>, vector<1x256x256xbf16>
    %34 = vector.shape_cast %33 : vector<1x256x256xbf16> to vector<256x256xbf16>
    %cst_41 = arith.constant dense<0.000000e+00> : vector<16x256xf32>
    %35 = tpu.matmul %32, %34, %cst_41 {dimension_numbers = #tpu.dot_dimension_numbers<[1], [0], [0], [1], [0, 0, 1, 1], [], []>} : vector<16x256xbf16>, vector<256x256xbf16>, vector<16x256xf32> -> vector<16x256xf32>
    %c0_42 = arith.constant 0 : index
    %c1_43 = arith.constant 1 : index
    %c0_44 = arith.constant 0 : index
    %36 = vector.load %arg7[%c0_42, %c1_43, %c0_44] : memref<1x18x256xbf16, #tpu.memory_space<vmem>>, vector<1x16x256xbf16>
    %37 = vector.shape_cast %36 : vector<1x16x256xbf16> to vector<16x256xbf16>
    %c1_45 = arith.constant 1 : index
    %c0_46 = arith.constant 0 : index
    %c0_47 = arith.constant 0 : index
    %38 = vector.load %arg4[%c1_45, %c0_46, %c0_47] : memref<3x256x256xbf16, #tpu.memory_space<vmem>>, vector<1x256x256xbf16>
    %39 = vector.shape_cast %38 : vector<1x256x256xbf16> to vector<256x256xbf16>
    %cst_48 = arith.constant dense<0.000000e+00> : vector<16x256xf32>
    %40 = tpu.matmul %37, %39, %cst_48 {dimension_numbers = #tpu.dot_dimension_numbers<[1], [0], [0], [1], [0, 0, 1, 1], [], []>} : vector<16x256xbf16>, vector<256x256xbf16>, vector<16x256xf32> -> vector<16x256xf32>
    %41 = arith.addf %35, %40 : vector<16x256xf32>
    %c0_49 = arith.constant 0 : index
    %c2_50 = arith.constant 2 : index
    %c0_51 = arith.constant 0 : index
    %42 = vector.load %arg7[%c0_49, %c2_50, %c0_51] : memref<1x18x256xbf16, #tpu.memory_space<vmem>>, vector<1x16x256xbf16>
    %43 = vector.shape_cast %42 : vector<1x16x256xbf16> to vector<16x256xbf16>
    %c2_52 = arith.constant 2 : index
    %c0_53 = arith.constant 0 : index
    %c0_54 = arith.constant 0 : index
    %44 = vector.load %arg4[%c2_52, %c0_53, %c0_54] : memref<3x256x256xbf16, #tpu.memory_space<vmem>>, vector<1x256x256xbf16>
    %45 = vector.shape_cast %44 : vector<1x256x256xbf16> to vector<256x256xbf16>
    %cst_55 = arith.constant dense<0.000000e+00> : vector<16x256xf32>
    %46 = tpu.matmul %43, %45, %cst_55 {dimension_numbers = #tpu.dot_dimension_numbers<[1], [0], [0], [1], [0, 0, 1, 1], [], []>} : vector<16x256xbf16>, vector<256x256xbf16>, vector<16x256xf32> -> vector<16x256xf32>
    %47 = arith.addf %41, %46 : vector<16x256xf32>
    %c0_56 = arith.constant 0 : index
    %c0_57 = arith.constant 0 : index
    %48 = vector.load %arg5[%c0_56, %c0_57] : memref<1x256xf32, #tpu.memory_space<vmem>>, vector<1x256xf32>
    %49 = vector.broadcast %48 : vector<1x256xf32> to vector<16x256xf32>
    %50 = arith.addf %47, %49 : vector<16x256xf32>
    %51 = vector.shape_cast %50 : vector<16x256xf32> to vector<1x16x256xf32>
    %52 = arith.addf %3, %51 : vector<1x16x256xf32>
    %c0_58 = arith.constant 0 : index
    %c0_59 = arith.constant 0 : index
    %c0_60 = arith.constant 0 : index
    %53 = vector.load %arg6[%c0_58, %c0_59, %c0_60] : memref<1x16x256xf32, #tpu.memory_space<vmem>>, vector<1x16x256xf32>
    tpu.vector_store %arg6[%c0_58, %c0_59, %c0_60], %52 {strides = array<i32>} : memref<1x16x256xf32, #tpu.memory_space<vmem>>, vector<1x16x256xf32>,
    return
  }
  func.func @transform_0(%arg0: i32) -> (i32, i32, i32) {
    %c0_i32 = arith.constant 0 : i32
    %c0_i32_0 = arith.constant 0 : i32
    %c0_i32_1 = arith.constant 0 : i32
    return %arg0, %c0_i32, %c0_i32_0 : i32, i32, i32
  }
  func.func @transform_1(%arg0: i32) -> (i32, i32, i32) {
    %c0_i32 = arith.constant 0 : i32
    %c0_i32_0 = arith.constant 0 : i32
    %c0_i32_1 = arith.constant 0 : i32
    %c0_i32_2 = arith.constant 0 : i32
    return %c0_i32, %c0_i32_0, %c0_i32_1 : i32, i32, i32
  }
  func.func @transform_2(%arg0: i32) -> (i32, i32) {
    %c0_i32 = arith.constant 0 : i32
    %c0_i32_0 = arith.constant 0 : i32
    %c0_i32_1 = arith.constant 0 : i32
    return %c0_i32, %c0_i32_0 : i32, i32
  }
  func.func @transform_3(%arg0: i32) -> (i32, i32, i32) {
    %c0_i32 = arith.constant 0 : i32
    %c0_i32_0 = arith.constant 0 : i32
    %c0_i32_1 = arith.constant 0 : i32
    %c0_i32_2 = arith.constant 0 : i32
    return %c0_i32, %c0_i32_0, %c0_i32_1 : i32, i32, i32
  }
  func.func @transform_4(%arg0: i32) -> (i32, i32) {
    %c0_i32 = arith.constant 0 : i32
    %c0_i32_0 = arith.constant 0 : i32
    %c0_i32_1 = arith.constant 0 : i32
    return %c0_i32, %c0_i32_0 : i32, i32
  }
  func.func @transform_5(%arg0: i32) -> (i32, i32, i32) {
    %c0_i32 = arith.constant 0 : i32
    %c0_i32_0 = arith.constant 0 : i32
    %c0_i32_1 = arith.constant 0 : i32
    return %arg0, %c0_i32, %c0_i32_0 : i32, i32, i32
  }
}

</mosaic_0001>

<llo_original>
// kernel: tpu_custom_call.1
$region0: #{tpu_custom_call.1}
  #allocation0 [shape = 'u32[]', space=smem, size = 0x4, offset = 0x4, fixed_abs, tag = 'smem constant byte address 0x4 - core index']
  #allocation1 [shape = 'u32[144,128]{1,0:T(1,128)}', space=vmem, size = 0x12000, scoped, tag = 'internal scratch']
  #allocation2 [shape = 'bf16[1,18,256]{2,1,0:T(8,128)(2,1)}', space=vmem, size = 0x3000, scoped, tag = 'scratch operand']
  %s0 = inlined_call_operand.hbm [shape: f32[2,16,256], index: 0, kind: input, shape index: {}]
  %s1 = inlined_call_operand.hbm [shape: bf16[3,256,256], index: 1, kind: input, shape index: {}]
  %s2 = inlined_call_operand.vmem [shape: f32[1,256], index: 2, kind: input, shape index: {}]
  %s3 = inlined_call_operand.hbm [shape: bf16[3,256,256], index: 3, kind: input, shape index: {}]
  %s4 = inlined_call_operand.vmem [shape: f32[1,256], index: 4, kind: input, shape index: {}]
  %s5 = inlined_call_operand.hbm [shape: f32[2,16,256], index: 5, kind: output, shape index: {}]
  %s6 = sld [smem:[#allocation0]]
  $region65: #{tpu_custom_call.1} parent=0
    _
  %s8 = ssub.s32 1, %s6
  %s9 = scalar_select 0, %s8, %s6
  $region1: #{tpu_custom_call.1} parent=0
    #allocation3 [shape = 'u8[32768]{0}', space=vmem, size = 0x8000, scoped, tag = 'input window, operand 0']
    #allocation4 [shape = 's32[2]{0}', space=sflag, size = 0x8, scoped, tag = 'scoped memory for tpu_custom_call.1']
    #allocation5 [shape = 's32[2]{0}', space=sflag, size = 0x8, scoped, tag = 'scoped memory for tpu_custom_call.1']
    #allocation6 [shape = 'u8[393216]{0}', space=vmem, size = 0x60000, scoped, tag = 'input window, operand 1, single buffered']
    #allocation7 [shape = 's32[1]{0}', space=sflag, size = 0x4, scoped, tag = 'scoped memory for tpu_custom_call.1']
    #allocation8 [shape = 'u8[393216]{0}', space=vmem, size = 0x60000, scoped, tag = 'input window, operand 3, single buffered']
    #allocation9 [shape = 'u8[32768]{0}', space=vmem, size = 0x8000, scoped, tag = 'output window, operand 0']
    %10 = vsyncpa [#allocation4], 0
    %s11 = scalar_lea.sflag [#allocation4], 1
    %12 = vsyncpa %s11, 0
    %13 = vsyncpa [#allocation7], 0
    %14 = vsyncpa [#allocation5], 0
    %s15 = scalar_lea.sflag [#allocation5], 1
    %16 = vsyncpa %s15, 0
    loop: start=0, step=1, limit=4
    $region2: #{tpu_custom_call.1} parent=1 // loop_pre_header
      _
    $region3: #{tpu_custom_call.1} parent=1 // loop_header
      %s18 = sphi 0, %s22
      %p19 = scmp.ge.s32.totalorder %s18, 4
      %s28 = sphi 0, %s30
      %s31 = sphi 0, %s28
      %s32 = sphi 0, %s31
      %s48 = sphi 0, %s32
      %s52 = sphi 0, %s52
      %s54 = sphi 0, %s52
      %s55 = sphi 0, %s54
      %s69 = sphi 0, %s55
      %s73 = sphi 0, %s73
      %s75 = sphi 0, %s73
      %s76 = sphi 0, %s75
      %s90 = sphi 0, %s76
      %s94 = sphi 0, %s94
      %s96 = sphi 0, %s94
      %s97 = sphi 0, %s96
      %s111 = sphi 0, %s97
      %s115 = sphi 0, %s115
      %s117 = sphi 0, %s115
      %s118 = sphi 0, %s117
      %s132 = sphi 0, %s118
      %s138 = sphi 0, %s140
      %s141 = sphi 0, %s138
      %s142 = sphi 0, %s141
      %s158 = sphi 0, %s142
    $region4: #{tpu_custom_call.1} parent=1 // loop_header_branch
      %21 = sbr.rel (%p19) target = $region8
    $region5: #{tpu_custom_call.1} parent=1 // loop_body
      %s23 = ssub.s32 %s18, 1
      %s24 = ssub.s32 %s18, 2
      %s25 = sadd.s32 %s18, 1
      %s26 = ssub.s32 %s18, %s25
      %p27 = scmp.eq.s32.totalorder %s26, 0
      %s29 = sadd.s32 %s28, 1
      %s30 = scalar_select %p27, %s28, %s29
      %p33 = pneg %p27
      %p34 = scmp.eq.s32.totalorder %s18, 1
      %p35 = por %p33, %p34
      %p36 = scmp.ne.s32.totalorder %s28, %s31
      %p37 = scmp.eq.s32.totalorder %s18, 0
      %p38 = por %p36, %p37
      %p39 = scmp.ne.s32.totalorder %s28, %s31
      %p40 = scmp.eq.s32.totalorder %s23, 1
      %p41 = por %p39, %p40
      %p42 = scmp.ne.s32.totalorder %s31, %s32
      %p43 = scmp.eq.s32.totalorder %s23, 0
      %p44 = por %p42, %p43
      %p45 = scmp.ne.s32.totalorder %s31, %s32
      %p46 = scmp.eq.s32.totalorder %s24, 1
      %p47 = por %p45, %p46
      %p49 = scmp.ne.s32.totalorder %s32, %s48
      %p50 = scmp.eq.s32.totalorder %s24, 0
      %p51 = por %p49, %p50
      %s53 = sadd.s32 %s52, 1
      %p56 = scmp.eq.s32.totalorder %s18, 1
      %p57 = scmp.ne.s32.totalorder %s52, %s54
      %p58 = scmp.eq.s32.totalorder %s18, 0
      %p59 = por %p57, %p58
      %p60 = scmp.ne.s32.totalorder %s52, %s54
      %p61 = scmp.eq.s32.totalorder %s23, 1
      %p62 = por %p60, %p61
      %p63 = scmp.ne.s32.totalorder %s54, %s55
      %p64 = scmp.eq.s32.totalorder %s23, 0
      %p65 = por %p63, %p64
      %p66 = scmp.ne.s32.totalorder %s54, %s55
      %p67 = scmp.eq.s32.totalorder %s24, 1
      %p68 = por %p66, %p67
      %p70 = scmp.ne.s32.totalorder %s55, %s69
      %p71 = scmp.eq.s32.totalorder %s24, 0
      %p72 = por %p70, %p71
      %s74 = sadd.s32 %s73, 1
      %p77 = scmp.eq.s32.totalorder %s18, 1
      %p78 = scmp.ne.s32.totalorder %s73, %s75
      %p79 = scmp.eq.s32.totalorder %s18, 0
      %p80 = por %p78, %p79
      %p81 = scmp.ne.s32.totalorder %s73, %s75
      %p82 = scmp.eq.s32.totalorder %s23, 1
      %p83 = por %p81, %p82
      %p84 = scmp.ne.s32.totalorder %s75, %s76
      %p85 = scmp.eq.s32.totalorder %s23, 0
      %p86 = por %p84, %p85
      %p87 = scmp.ne.s32.totalorder %s75, %s76
      %p88 = scmp.eq.s32.totalorder %s24, 1
      %p89 = por %p87, %p88
      %p91 = scmp.ne.s32.totalorder %s76, %s90
      %p92 = scmp.eq.s32.totalorder %s24, 0
      %p93 = por %p91, %p92
      %s95 = sadd.s32 %s94, 1
      %p98 = scmp.eq.s32.totalorder %s18, 1
      %p99 = scmp.ne.s32.totalorder %s94, %s96
      %p100 = scmp.eq.s32.totalorder %s18, 0
      %p101 = por %p99, %p100
      %p102 = scmp.ne.s32.totalorder %s94, %s96
      %p103 = scmp.eq.s32.totalorder %s23, 1
      %p104 = por %p102, %p103
      %p105 = scmp.ne.s32.totalorder %s96, %s97
      %p106 = scmp.eq.s32.totalorder %s23, 0
      %p107 = por %p105, %p106
      %p108 = scmp.ne.s32.totalorder %s96, %s97
      %p109 = scmp.eq.s32.totalorder %s24, 1
      %p110 = por %p108, %p109
      %p112 = scmp.ne.s32.totalorder %s97, %s111
      %p113 = scmp.eq.s32.totalorder %s24, 0
      %p114 = por %p112, %p113
      %s116 = sadd.s32 %s115, 1
      %p119 = scmp.eq.s32.totalorder %s18, 1
      %p120 = scmp.ne.s32.totalorder %s115, %s117
      %p121 = scmp.eq.s32.totalorder %s18, 0
      %p122 = por %p120, %p121
      %p123 = scmp.ne.s32.totalorder %s115, %s117
      %p124 = scmp.eq.s32.totalorder %s23, 1
      %p125 = por %p123, %p124
      %p126 = scmp.ne.s32.totalorder %s117, %s118
      %p127 = scmp.eq.s32.totalorder %s23, 0
      %p128 = por %p126, %p127
      %p129 = scmp.ne.s32.totalorder %s117, %s118
      %p130 = scmp.eq.s32.totalorder %s24, 1
      %p131 = por %p129, %p130
      %p133 = scmp.ne.s32.totalorder %s118, %s132
      %p134 = scmp.eq.s32.totalorder %s24, 0
      %p135 = por %p133, %p134
      %s136 = ssub.s32 %s18, %s25
      %p137 = scmp.eq.s32.totalorder %s136, 0
      %s139 = sadd.s32 %s138, 1
      %s140 = scalar_select %p137, %s138, %s139
      %p143 = pneg %p137
      %p144 = scmp.eq.s32.totalorder %s18, 1
      %p145 = por %p143, %p144
      %p146 = scmp.ne.s32.totalorder %s138, %s141
      %p147 = scmp.eq.s32.totalorder %s18, 0
      %p148 = por %p146, %p147
      %p149 = scmp.ne.s32.totalorder %s138, %s141
      %p150 = scmp.eq.s32.totalorder %s23, 1
      %p151 = por %p149, %p150
      %p152 = scmp.ne.s32.totalorder %s141, %s142
      %p153 = scmp.eq.s32.totalorder %s23, 0
      %p154 = por %p152, %p153
      %p155 = scmp.ne.s32.totalorder %s141, %s142
      %p156 = scmp.eq.s32.totalorder %s24, 1
      %p157 = por %p155, %p156
      %p159 = scmp.ne.s32.totalorder %s142, %s158
      %p160 = scmp.eq.s32.totalorder %s24, 0
      %p161 = por %p159, %p160
      %p162 = scmp.le.s32.totalorder 1, %s18
      %p163 = scmp.lt.s32.totalorder %s18, 3
      %p164 = pnand %p162, %p163
      %p165 = pneg %p164
      // Predicated region
      $region9: #{tpu_custom_call.1} parent=5 // pred_check
        _
      $region10: #{tpu_custom_call.1} parent=5 // pred_check_branch
        %167 = sbr.rel (%p164) target = $region12
      $region11: #{tpu_custom_call.1} parent=5 // pred_region
        %s168 = ssub.s32 %s18, 1
        // Predicated region
        $region13: #{tpu_custom_call.1} parent=11 // pred_check
          %p169 = pneg %p65
        $region14: #{tpu_custom_call.1} parent=11 // pred_check_branch
          %171 = sbr.rel (%p169) target = $region16
        $region15: #{tpu_custom_call.1} parent=11 // pred_region
          %s173 = ssub.s32 12288, 12288
          %174 = vsyncadd [#allocation7], %s173
          %s175 = sshll.u32 [#allocation6], 4
          %s176 = int_to_ptr.vmem [resolvable:$true] %s175
          %181 = dma.hbm_to_vmem [thread:$0]  %s1, 12288, %s176, [#allocation7], 128, 128, 8
        $region16: #{tpu_custom_call.1} parent=11 // pred_fallthru
          _
        // Predicated region
        $region17: #{tpu_custom_call.1} parent=11 // pred_check
          %p182 = pneg %p86
        $region18: #{tpu_custom_call.1} parent=11 // pred_check_branch
          %184 = sbr.rel (%p182) target = $region20
        $region19: #{tpu_custom_call.1} parent=11 // pred_region
          _
        $region20: #{tpu_custom_call.1} parent=11 // pred_fallthru
          _
        // Predicated region
        $region21: #{tpu_custom_call.1} parent=11 // pred_check
          %p185 = pneg %p107
        $region22: #{tpu_custom_call.1} parent=11 // pred_check_branch
          %187 = sbr.rel (%p185) target = $region24
        $region23: #{tpu_custom_call.1} parent=11 // pred_region
          %s189 = ssub.s32 12288, 12288
          %190 = vsyncadd [#allocation7], %s189
          %s191 = sshll.u32 [#allocation8], 4
          %s192 = int_to_ptr.vmem [resolvable:$true] %s191
          %197 = dma.hbm_to_vmem [thread:$0]  %s3, 12288, %s192, [#allocation7], 128, 128, 8
        $region24: #{tpu_custom_call.1} parent=11 // pred_fallthru
          _
        // Predicated region
        $region25: #{tpu_custom_call.1} parent=11 // pred_check
          %p198 = pneg %p128
        $region26: #{tpu_custom_call.1} parent=11 // pred_check_branch
          %200 = sbr.rel (%p198) target = $region28
        $region27: #{tpu_custom_call.1} parent=11 // pred_region
          _
        $region28: #{tpu_custom_call.1} parent=11 // pred_fallthru
          _
      $region12: #{tpu_custom_call.1} parent=5 // pred_fallthru
        _
      %p201 = scmp.lt.s32.totalorder %s18, 2
      // Predicated region
      $region29: #{tpu_custom_call.1} parent=5 // pred_check
        %p202 = pneg %p201
      $region30: #{tpu_custom_call.1} parent=5 // pred_check_branch
        %204 = sbr.rel (%p202) target = $region32
      $region31: #{tpu_custom_call.1} parent=5 // pred_region
        // Predicated region
        $region33: #{tpu_custom_call.1} parent=31 // pred_check
          %p205 = pneg %p38
        $region34: #{tpu_custom_call.1} parent=31 // pred_check_branch
          %207 = sbr.rel (%p205) target = $region36
        $region35: #{tpu_custom_call.1} parent=31 // pred_region
          %s208 = sand.u32 %s28, 1
          %s209 = scalar_lea.sflag [#allocation4], %s208
          %s210 = sand.u32 %s28, 1
          %s211 = smul.addr %s210, 32
          %s212 = scalar_lea.vmem [#allocation3], %s211
          %s214 = ssub.s32 512, 512
          %215 = vsyncadd %s209, %s214
          %s216 = smul.addr %s18, 4
          %s217 = smul.addr %s216, 128
          %s218 = scalar_lea.hbm %s0, %s217
          %s219 = sshll.u32 %s212, 4
          %s220 = int_to_ptr.vmem [resolvable:$true] %s219
          %225 = dma.hbm_to_vmem [thread:$0]  %s218, 512, %s220, %s209, 256, 256, 16
        $region36: #{tpu_custom_call.1} parent=31 // pred_fallthru
          _
      $region32: #{tpu_custom_call.1} parent=5 // pred_fallthru
        _
      %p226 = scmp.le.s32.totalorder 1, %s18
      %p227 = scmp.lt.s32.totalorder %s18, 3
      %p228 = pnand %p226, %p227
      %p229 = pneg %p228
      // Predicated region
      $region37: #{tpu_custom_call.1} parent=5 // pred_check
        _
      $region38: #{tpu_custom_call.1} parent=5 // pred_check_branch
        %231 = sbr.rel (%p228) target = $region40
      $region39: #{tpu_custom_call.1} parent=5 // pred_region
        %s232 = ssub.s32 %s18, 1
        %s233 = sand.u32 %s31, 1
        %s234 = scalar_lea.sflag [#allocation4], %s233
        %s235 = sand.u32 %s31, 1
        %s236 = smul.addr %s235, 32
        %s237 = scalar_lea.vmem [#allocation3], %s236
        // Predicated region
        $region41: #{tpu_custom_call.1} parent=39 // pred_check
          %p238 = pneg %p44
        $region42: #{tpu_custom_call.1} parent=39 // pred_check_branch
          %240 = sbr.rel (%p238) target = $region44
        $region43: #{tpu_custom_call.1} parent=39 // pred_region
          %241 = dma.done %s234, 512
        $region44: #{tpu_custom_call.1} parent=39 // pred_fallthru
          _
        // Predicated region
        $region45: #{tpu_custom_call.1} parent=39 // pred_check
          %p242 = pneg %p65
        $region46: #{tpu_custom_call.1} parent=39 // pred_check_branch
          %244 = sbr.rel (%p242) target = $region48
        $region47: #{tpu_custom_call.1} parent=39 // pred_region
          %245 = dma.done [#allocation7], 12288
        $region48: #{tpu_custom_call.1} parent=39 // pred_fallthru
          _
        // Predicated region
        $region49: #{tpu_custom_call.1} parent=39 // pred_check
          %p246 = pneg %p107
        $region50: #{tpu_custom_call.1} parent=39 // pred_check_branch
          %248 = sbr.rel (%p246) target = $region52
        $region51: #{tpu_custom_call.1} parent=39 // pred_region
          %249 = dma.done [#allocation7], 12288
        $region52: #{tpu_custom_call.1} parent=39 // pred_fallthru
          _
        %s250 = sand.u32 %s31, 1
        %s251 = scalar_lea.sflag [#allocation4], %s250
        %s252 = sand.u32 %s31, 1
        %s253 = smul.addr %s252, 32
        %s254 = scalar_lea.vmem [#allocation3], %s253
        %p255 = pneg %p44
        %p256 = pneg %p41
        %p257 = pneg %p65
        %p258 = pneg %p62
        %p259 = pneg %p86
        %p260 = pneg %p83
        %p261 = pneg %p107
        %p262 = pneg %p104
        %p263 = pneg %p128
        %p264 = pneg %p125
        %p265 = pneg %p154
        %p266 = pneg %p151
        %s267 = sand.u32 %s141, 1
        %s268 = scalar_lea.sflag [#allocation5], %s267
        %s269 = sand.u32 %s141, 1
        %s270 = smul.addr %s269, 32
        %s271 = scalar_lea.vmem [#allocation9], %s270
        %vm273 = vcmask 1040384
        %vm274 = vsmask.f32 256
        %vm275 = vmand %vm273, %vm274
        %vm276 = vcmask 1044484
        %vm277 = vsmask.f32 4352
        %vm278 = vmand %vm276, %vm277
        %vm279 = vmor %vm278, %vm275
        %v280 = vld [vmem:[#allocation2] sm:$0x11]
        %v281 = vsel %vm279, 0, %v280
        %282 = vst [vmem:[#allocation2] sm:$0x11] %v281
        %vm283 = vsmask.f32 7938
        %vm284 = vmand %vm273, %vm283
        %vm285 = vsmask.f32 7954
        %vm286 = vmand %vm276, %vm285
        %vm287 = vmor %vm286, %vm284
        %v288 = vld [vmem:[#allocation2 + $0x10] sm:$0x11]
        %v289 = vsel %vm287, 0, %v288
        %290 = vst [vmem:[#allocation2 + $0x10] sm:$0x11] %v289
        %v291 = vld [vmem:[%s237] sm:$0xff]
        %v292 = vld [vmem:[%s237 + $0x8] sm:$0xff]
        %v293 = vld [vmem:[%s237 + $0x10] sm:$0xff]
        %v294 = vld [vmem:[%s237 + $0x18] sm:$0xff]
        %v295 = vpack.c.bf16 %v293, %v291
        %v296 = vpack.c.bf16 %v294, %v292
        %v299 = vunpack.c.l.b16 %v295
        %v300 = vunpack.c.l.b16 %v296
        %v301 = vunpack.c.h.b16 %v295
        %v302 = vunpack.c.h.b16 %v296
        %v303 = vpack.c.b16 %v300, %v299
        %v304 = vpack.c.b16 %v302, %v301
        %vm305 = vsmask.f32 4368
        %vm306 = vmor %vm274, %vm305
        %v308 = vshrl.u32 %v303, 16
        %v310 = vrot.slane %v308, 7
        %v311 = vshll.u32 %v303, 16
        %v313 = vor.u32 %v310, %v311
        %v314 = vrot.slane %v310, 4
        %v316 = vshrl.u32 %v304, 16
        %v318 = vrot.slane %v316, 7
        %v319 = vshll.u32 %v304, 16
        %v321 = vor.u32 %v318, %v319
        %v322 = vsel %vm306, %v314, %v321
        %v323 = vrot.slane %v318, 4
        %vm327 = vcmask 1043456
        %vm328 = vmand %vm327, %vm283
        %vm329 = vcmask 1047556
        %vm330 = vmand %vm329, %vm285
        %vm331 = vmor %vm330, %vm328
        %v332 = vld [vmem:[#allocation2] sm:$0xff]
        %v333 = vsel %vm331, %v313, %v332
        %334 = vst [vmem:[#allocation2] sm:$0xff] %v333
        %335 = vst [vmem:[#allocation2 + $0x8] sm:$0xff] %v322
        %v336 = vld [vmem:[#allocation2 + $0x10] sm:$0x11]
        %v337 = vsel %vm279, %v323, %v336
        %338 = vst [vmem:[#allocation2 + $0x10] sm:$0x11] %v337
        %v339 = vld [vmem:[#allocation2] sm:$0xff]
        %v340 = vld [vmem:[#allocation2 + $0x8] sm:$0xff]
        %v341 = vld [vmem:[#allocation6] sm:$0xff]
        %v342 = vld [vmem:[#allocation6 + $0x8] sm:$0xff]
        %v343 = vld [vmem:[#allocation6 + $0x10] sm:$0xff]
        %v344 = vld [vmem:[#allocation6 + $0x18] sm:$0xff]
        %v345 = vld [vmem:[#allocation6 + $0x20] sm:$0xff]
        %v346 = vld [vmem:[#allocation6 + $0x28] sm:$0xff]
        %v347 = vld [vmem:[#allocation6 + $0x30] sm:$0xff]
        %v348 = vld [vmem:[#allocation6 + $0x38] sm:$0xff]
        %v349 = vld [vmem:[#allocation6 + $0x40] sm:$0xff]
        %v350 = vld [vmem:[#allocation6 + $0x48] sm:$0xff]
        %v351 = vld [vmem:[#allocation6 + $0x50] sm:$0xff]
        %v352 = vld [vmem:[#allocation6 + $0x58] sm:$0xff]
        %v353 = vld [vmem:[#allocation6 + $0x60] sm:$0xff]
        %v354 = vld [vmem:[#allocation6 + $0x68] sm:$0xff]
        %v355 = vld [vmem:[#allocation6 + $0x70] sm:$0xff]
        %v356 = vld [vmem:[#allocation6 + $0x78] sm:$0xff]
        %v357 = vld [vmem:[#allocation6 + $0x80] sm:$0xff]
        %v358 = vld [vmem:[#allocation6 + $0x88] sm:$0xff]
        %v359 = vld [vmem:[#allocation6 + $0x90] sm:$0xff]
        %v360 = vld [vmem:[#allocation6 + $0x98] sm:$0xff]
        %v361 = vld [vmem:[#allocation6 + $0xa0] sm:$0xff]
        %v362 = vld [vmem:[#allocation6 + $0xa8] sm:$0xff]
        %v363 = vld [vmem:[#allocation6 + $0xb0] sm:$0xff]
        %v364 = vld [vmem:[#allocation6 + $0xb8] sm:$0xff]
        %v365 = vld [vmem:[#allocation6 + $0xc0] sm:$0xff]
        %v366 = vld [vmem:[#allocation6 + $0xc8] sm:$0xff]
        %v367 = vld [vmem:[#allocation6 + $0xd0] sm:$0xff]
        %v368 = vld [vmem:[#allocation6 + $0xd8] sm:$0xff]
        %v369 = vld [vmem:[#allocation6 + $0xe0] sm:$0xff]
        %v370 = vld [vmem:[#allocation6 + $0xe8] sm:$0xff]
        %v371 = vld [vmem:[#allocation6 + $0xf0] sm:$0xff]
        %v372 = vld [vmem:[#allocation6 + $0xf8] sm:$0xff]
        %v373 = vld [vmem:[#allocation2 + $0x10] sm:$0x11]
        %s374 = scalar_lea.vmem [#allocation6], 256
        %v375 = vld [vmem:[%s374] sm:$0xff]
        %v376 = vld [vmem:[%s374 + $0x8] sm:$0xff]
        %v377 = vld [vmem:[%s374 + $0x10] sm:$0xff]
        %v378 = vld [vmem:[%s374 + $0x18] sm:$0xff]
        %v379 = vld [vmem:[%s374 + $0x20] sm:$0xff]
        %v380 = vld [vmem:[%s374 + $0x28] sm:$0xff]
        %v381 = vld [vmem:[%s374 + $0x30] sm:$0xff]
        %v382 = vld [vmem:[%s374 + $0x38] sm:$0xff]
        %v383 = vld [vmem:[%s374 + $0x40] sm:$0xff]
        %v384 = vld [vmem:[%s374 + $0x48] sm:$0xff]
        %v385 = vld [vmem:[%s374 + $0x50] sm:$0xff]
        %v386 = vld [vmem:[%s374 + $0x58] sm:$0xff]
        %v387 = vld [vmem:[%s374 + $0x60] sm:$0xff]
        %v388 = vld [vmem:[%s374 + $0x68] sm:$0xff]
        %v389 = vld [vmem:[%s374 + $0x70] sm:$0xff]
        %v390 = vld [vmem:[%s374 + $0x78] sm:$0xff]
        %v391 = vld [vmem:[%s374 + $0x80] sm:$0xff]
        %v392 = vld [vmem:[%s374 + $0x88] sm:$0xff]
        %v393 = vld [vmem:[%s374 + $0x90] sm:$0xff]
        %v394 = vld [vmem:[%s374 + $0x98] sm:$0xff]
        %v395 = vld [vmem:[%s374 + $0xa0] sm:$0xff]
        %v396 = vld [vmem:[%s374 + $0xa8] sm:$0xff]
        %v397 = vld [vmem:[%s374 + $0xb0] sm:$0xff]
        %v398 = vld [vmem:[%s374 + $0xb8] sm:$0xff]
        %v399 = vld [vmem:[%s374 + $0xc0] sm:$0xff]
        %v400 = vld [vmem:[%s374 + $0xc8] sm:$0xff]
        %v401 = vld [vmem:[%s374 + $0xd0] sm:$0xff]
        %v402 = vld [vmem:[%s374 + $0xd8] sm:$0xff]
        %v403 = vld [vmem:[%s374 + $0xe0] sm:$0xff]
        %v404 = vld [vmem:[%s374 + $0xe8] sm:$0xff]
        %v405 = vld [vmem:[%s374 + $0xf0] sm:$0xff]
        %v406 = vld [vmem:[%s374 + $0xf8] sm:$0xff]
        %v410 = vunpack.c.l.b16 %v339
        %v411 = vunpack.c.h.b16 %v339
        %v412 = vunpack.c.l.b16 %v340
        %v413 = vunpack.c.h.b16 %v340
        %v414 = vunpack.c.l.b16 %v373
        %v415 = vunpack.c.h.b16 %v373
        %v416 = vpack.c.b16 %v412, %v410
        %v417 = vpack.c.b16 %v413, %v411
        %v418 = vpack.c.b16 %v414, %v414
        %v419 = vpack.c.b16 %v415, %v415
        %vm420 = vsmask.f32 7424
        %v422 = vshrl.u32 %v416, 16
        %v424 = vshll.u32 %v416, 16
        %v426 = vrot.slane %v424, 1
        %v427 = vor.u32 %v422, %v426
        %v429 = vshll.u32 %v418, 16
        %v431 = vrot.slane %v429, 1
        %v432 = vsel %vm420, %v427, %v431
        %v434 = vshrl.u32 %v417, 16
        %v436 = vshll.u32 %v417, 16
        %v438 = vrot.slane %v436, 1
        %v439 = vor.u32 %v434, %v438
        %v441 = vshll.u32 %v419, 16
        %v443 = vrot.slane %v441, 1
        %v444 = vsel %vm420, %v439, %v443
        %v479 = vunpack.c.l.b16 %v375
        %v480 = vunpack.c.h.b16 %v375
        %v481 = vunpack.c.l.b16 %v376
        %v482 = vunpack.c.h.b16 %v376
        %v483 = vunpack.c.l.b16 %v377
        %v484 = vunpack.c.h.b16 %v377
        %v485 = vunpack.c.l.b16 %v378
        %v486 = vunpack.c.h.b16 %v378
        %v487 = vunpack.c.l.b16 %v379
        %v488 = vunpack.c.h.b16 %v379
        %v489 = vunpack.c.l.b16 %v380
        %v490 = vunpack.c.h.b16 %v380
        %v491 = vunpack.c.l.b16 %v381
        %v492 = vunpack.c.h.b16 %v381
        %v493 = vunpack.c.l.b16 %v382
        %v494 = vunpack.c.h.b16 %v382
        %v495 = vunpack.c.l.b16 %v383
        %v496 = vunpack.c.h.b16 %v383
        %v497 = vunpack.c.l.b16 %v384
        %v498 = vunpack.c.h.b16 %v384
        %v499 = vunpack.c.l.b16 %v385
        %v500 = vunpack.c.h.b16 %v385
        %v501 = vunpack.c.l.b16 %v386
        %v502 = vunpack.c.h.b16 %v386
        %v503 = vunpack.c.l.b16 %v387
        %v504 = vunpack.c.h.b16 %v387
        %v505 = vunpack.c.l.b16 %v388
        %v506 = vunpack.c.h.b16 %v388
        %v507 = vunpack.c.l.b16 %v389
        %v508 = vunpack.c.h.b16 %v389
        %v509 = vunpack.c.l.b16 %v390
        %v510 = vunpack.c.h.b16 %v390
        %v511 = vunpack.c.l.b16 %v391
        %v512 = vunpack.c.h.b16 %v391
        %v513 = vunpack.c.l.b16 %v392
        %v514 = vunpack.c.h.b16 %v392
        %v515 = vunpack.c.l.b16 %v393
        %v516 = vunpack.c.h.b16 %v393
        %v517 = vunpack.c.l.b16 %v394
        %v518 = vunpack.c.h.b16 %v394
        %v519 = vunpack.c.l.b16 %v395
        %v520 = vunpack.c.h.b16 %v395
        %v521 = vunpack.c.l.b16 %v396
        %v522 = vunpack.c.h.b16 %v396
        %v523 = vunpack.c.l.b16 %v397
        %v524 = vunpack.c.h.b16 %v397
        %v525 = vunpack.c.l.b16 %v398
        %v526 = vunpack.c.h.b16 %v398
        %v527 = vunpack.c.l.b16 %v399
        %v528 = vunpack.c.h.b16 %v399
        %v529 = vunpack.c.l.b16 %v400
        %v530 = vunpack.c.h.b16 %v400
        %v531 = vunpack.c.l.b16 %v401
        %v532 = vunpack.c.h.b16 %v401
        %v533 = vunpack.c.l.b16 %v402
        %v534 = vunpack.c.h.b16 %v402
        %v535 = vunpack.c.l.b16 %v403
        %v536 = vunpack.c.h.b16 %v403
        %v537 = vunpack.c.l.b16 %v404
        %v538 = vunpack.c.h.b16 %v404
        %v539 = vunpack.c.l.b16 %v405
        %v540 = vunpack.c.h.b16 %v405
        %v541 = vunpack.c.l.b16 %v406
        %v542 = vunpack.c.h.b16 %v406
        %v543 = vpack.c.b16 %v481, %v479
        %v544 = vpack.c.b16 %v482, %v480
        %v545 = vpack.c.b16 %v485, %v483
        %v546 = vpack.c.b16 %v486, %v484
        %v547 = vpack.c.b16 %v489, %v487
        %v548 = vpack.c.b16 %v490, %v488
        %v549 = vpack.c.b16 %v493, %v491
        %v550 = vpack.c.b16 %v494, %v492
        %v551 = vpack.c.b16 %v497, %v495
        %v552 = vpack.c.b16 %v498, %v496
        %v553 = vpack.c.b16 %v501, %v499
        %v554 = vpack.c.b16 %v502, %v500
        %v555 = vpack.c.b16 %v505, %v503
        %v556 = vpack.c.b16 %v506, %v504
        %v557 = vpack.c.b16 %v509, %v507
        %v558 = vpack.c.b16 %v510, %v508
        %v559 = vpack.c.b16 %v513, %v511
        %v560 = vpack.c.b16 %v514, %v512
        %v561 = vpack.c.b16 %v517, %v515
        %v562 = vpack.c.b16 %v518, %v516
        %v563 = vpack.c.b16 %v521, %v519
        %v564 = vpack.c.b16 %v522, %v520
        %v565 = vpack.c.b16 %v525, %v523
        %v566 = vpack.c.b16 %v526, %v524
        %v567 = vpack.c.b16 %v529, %v527
        %v568 = vpack.c.b16 %v530, %v528
        %v569 = vpack.c.b16 %v533, %v531
        %v570 = vpack.c.b16 %v534, %v532
        %v571 = vpack.c.b16 %v537, %v535
        %v572 = vpack.c.b16 %v538, %v536
        %v573 = vpack.c.b16 %v541, %v539
        %v574 = vpack.c.b16 %v542, %v540
        %607 = vmatprep.subr.bf16.mxu0 %v558
        %608 = vmatpush1.bf16.msra.mxu0 %v557
        %609 = vmatprep.subr.bf16.mxu0 %v556
        %610 = vmatpush1.bf16.msra.mxu0 %v555
        %611 = vmatprep.subr.bf16.mxu0 %v554
        %612 = vmatpush1.bf16.msra.mxu0 %v553
        %613 = vmatprep.subr.bf16.mxu0 %v552
        %614 = vmatpush1.bf16.msra.mxu0 %v551
        %615 = vmatprep.subr.bf16.mxu0 %v550
        %616 = vmatpush1.bf16.msra.mxu0 %v549
        %617 = vmatprep.subr.bf16.mxu0 %v548
        %618 = vmatpush1.bf16.msra.mxu0 %v547
        %619 = vmatprep.subr.bf16.mxu0 %v546
        %620 = vmatpush1.bf16.msra.mxu0 %v545
        %621 = vmatprep.subr.bf16.mxu0 %v544
        %622 = vmatpush1.bf16.msra.mxu0 %v543
        %623 = vmatprep.subr.bf16.mxu0 %v574
        %624 = vmatpush2.bf16.msra.mxu0 %v573
        %625 = vmatprep.subr.bf16.mxu0 %v572
        %626 = vmatpush2.bf16.msra.mxu0 %v571
        %627 = vmatprep.subr.bf16.mxu0 %v570
        %628 = vmatpush2.bf16.msra.mxu0 %v569
        %629 = vmatprep.subr.bf16.mxu0 %v568
        %630 = vmatpush2.bf16.msra.mxu0 %v567
        %631 = vmatprep.subr.bf16.mxu0 %v566
        %632 = vmatpush2.bf16.msra.mxu0 %v565
        %633 = vmatprep.subr.bf16.mxu0 %v564
        %634 = vmatpush2.bf16.msra.mxu0 %v563
        %635 = vmatprep.subr.bf16.mxu0 %v562
        %636 = vmatpush2.bf16.msra.mxu0 %v561
        %637 = vmatprep.subr.bf16.mxu0 %v560
        %638 = vmatpush2.bf16.msra.mxu0 %v559
        %639 = vmatprep.mubr.bf16.mxu0 %v444
        %640 = vmatmul.mubr.bf16.gmra.mxu0 %v432
        %v641 = vpop.f32.mrf.mxu0
        %v642 = vadd.f32 0.0, %v641
        %v643 = vpop.f32.mrf.mxu0
        %v644 = vadd.f32 0.0, %v643
        %v645 = vpop.f32.mrf.mxu0
        %v646 = vadd.f32 0.0, %v645
        %v647 = vpop.f32.mrf.mxu0
        %v648 = vadd.f32 0.0, %v647
        %649 = vdwg.mxu0
        %v684 = vunpack.c.l.b16 %v341
        %v685 = vunpack.c.h.b16 %v341
        %v686 = vunpack.c.l.b16 %v342
        %v687 = vunpack.c.h.b16 %v342
        %v688 = vunpack.c.l.b16 %v343
        %v689 = vunpack.c.h.b16 %v343
        %v690 = vunpack.c.l.b16 %v344
        %v691 = vunpack.c.h.b16 %v344
        %v692 = vunpack.c.l.b16 %v345
        %v693 = vunpack.c.h.b16 %v345
        %v694 = vunpack.c.l.b16 %v346
        %v695 = vunpack.c.h.b16 %v346
        %v696 = vunpack.c.l.b16 %v347
        %v697 = vunpack.c.h.b16 %v347
        %v698 = vunpack.c.l.b16 %v348
        %v699 = vunpack.c.h.b16 %v348
        %v700 = vunpack.c.l.b16 %v349
        %v701 = vunpack.c.h.b16 %v349
        %v702 = vunpack.c.l.b16 %v350
        %v703 = vunpack.c.h.b16 %v350
        %v704 = vunpack.c.l.b16 %v351
        %v705 = vunpack.c.h.b16 %v351
        %v706 = vunpack.c.l.b16 %v352
        %v707 = vunpack.c.h.b16 %v352
        %v708 = vunpack.c.l.b16 %v353
        %v709 = vunpack.c.h.b16 %v353
        %v710 = vunpack.c.l.b16 %v354
        %v711 = vunpack.c.h.b16 %v354
        %v712 = vunpack.c.l.b16 %v355
        %v713 = vunpack.c.h.b16 %v355
        %v714 = vunpack.c.l.b16 %v356
        %v715 = vunpack.c.h.b16 %v356
        %v716 = vunpack.c.l.b16 %v357
        %v717 = vunpack.c.h.b16 %v357
        %v718 = vunpack.c.l.b16 %v358
        %v719 = vunpack.c.h.b16 %v358
        %v720 = vunpack.c.l.b16 %v359
        %v721 = vunpack.c.h.b16 %v359
        %v722 = vunpack.c.l.b16 %v360
        %v723 = vunpack.c.h.b16 %v360
        %v724 = vunpack.c.l.b16 %v361
        %v725 = vunpack.c.h.b16 %v361
        %v726 = vunpack.c.l.b16 %v362
        %v727 = vunpack.c.h.b16 %v362
        %v728 = vunpack.c.l.b16 %v363
        %v729 = vunpack.c.h.b16 %v363
        %v730 = vunpack.c.l.b16 %v364
        %v731 = vunpack.c.h.b16 %v364
        %v732 = vunpack.c.l.b16 %v365
        %v733 = vunpack.c.h.b16 %v365
        %v734 = vunpack.c.l.b16 %v366
        %v735 = vunpack.c.h.b16 %v366
        %v736 = vunpack.c.l.b16 %v367
        %v737 = vunpack.c.h.b16 %v367
        %v738 = vunpack.c.l.b16 %v368
        %v739 = vunpack.c.h.b16 %v368
        %v740 = vunpack.c.l.b16 %v369
        %v741 = vunpack.c.h.b16 %v369
        %v742 = vunpack.c.l.b16 %v370
        %v743 = vunpack.c.h.b16 %v370
        %v744 = vunpack.c.l.b16 %v371
        %v745 = vunpack.c.h.b16 %v371
        %v746 = vunpack.c.l.b16 %v372
        %v747 = vunpack.c.h.b16 %v372
        %v748 = vpack.c.b16 %v686, %v684
        %v749 = vpack.c.b16 %v687, %v685
        %v750 = vpack.c.b16 %v690, %v688
        %v751 = vpack.c.b16 %v691, %v689
        %v752 = vpack.c.b16 %v694, %v692
        %v753 = vpack.c.b16 %v695, %v693
        %v754 = vpack.c.b16 %v698, %v696
        %v755 = vpack.c.b16 %v699, %v697
        %v756 = vpack.c.b16 %v702, %v700
        %v757 = vpack.c.b16 %v703, %v701
        %v758 = vpack.c.b16 %v706, %v704
        %v759 = vpack.c.b16 %v707, %v705
        %v760 = vpack.c.b16 %v710, %v708
        %v761 = vpack.c.b16 %v711, %v709
        %v762 = vpack.c.b16 %v714, %v712
        %v763 = vpack.c.b16 %v715, %v713
        %v764 = vpack.c.b16 %v718, %v716
        %v765 = vpack.c.b16 %v719, %v717
        %v766 = vpack.c.b16 %v722, %v720
        %v767 = vpack.c.b16 %v723, %v721
        %v768 = vpack.c.b16 %v726, %v724
        %v769 = vpack.c.b16 %v727, %v725
        %v770 = vpack.c.b16 %v730, %v728
        %v771 = vpack.c.b16 %v731, %v729
        %v772 = vpack.c.b16 %v734, %v732
        %v773 = vpack.c.b16 %v735, %v733
        %v774 = vpack.c.b16 %v738, %v736
        %v775 = vpack.c.b16 %v739, %v737
        %v776 = vpack.c.b16 %v742, %v740
        %v777 = vpack.c.b16 %v743, %v741
        %v778 = vpack.c.b16 %v746, %v744
        %v779 = vpack.c.b16 %v747, %v745
        %812 = vmatprep.subr.bf16.mxu0 %v763
        %813 = vmatpush1.bf16.msra.mxu0 %v762
        %814 = vmatprep.subr.bf16.mxu0 %v761
        %815 = vmatpush1.bf16.msra.mxu0 %v760
        %816 = vmatprep.subr.bf16.mxu0 %v759
        %817 = vmatpush1.bf16.msra.mxu0 %v758
        %818 = vmatprep.subr.bf16.mxu0 %v757
        %819 = vmatpush1.bf16.msra.mxu0 %v756
        %820 = vmatprep.subr.bf16.mxu0 %v755
        %821 = vmatpush1.bf16.msra.mxu0 %v754
        %822 = vmatprep.subr.bf16.mxu0 %v753
        %823 = vmatpush1.bf16.msra.mxu0 %v752
        %824 = vmatprep.subr.bf16.mxu0 %v751
        %825 = vmatpush1.bf16.msra.mxu0 %v750
        %826 = vmatprep.subr.bf16.mxu0 %v749
        %827 = vmatpush1.bf16.msra.mxu0 %v748
        %828 = vmatprep.subr.bf16.mxu0 %v779
        %829 = vmatpush2.bf16.msra.mxu0 %v778
        %830 = vmatprep.subr.bf16.mxu0 %v777
        %831 = vmatpush2.bf16.msra.mxu0 %v776
        %832 = vmatprep.subr.bf16.mxu0 %v775
        %833 = vmatpush2.bf16.msra.mxu0 %v774
        %834 = vmatprep.subr.bf16.mxu0 %v773
        %835 = vmatpush2.bf16.msra.mxu0 %v772
        %836 = vmatprep.subr.bf16.mxu0 %v771
        %837 = vmatpush2.bf16.msra.mxu0 %v770
        %838 = vmatprep.subr.bf16.mxu0 %v769
        %839 = vmatpush2.bf16.msra.mxu0 %v768
        %840 = vmatprep.subr.bf16.mxu0 %v767
        %841 = vmatpush2.bf16.msra.mxu0 %v766
        %842 = vmatprep.subr.bf16.mxu0 %v765
        %843 = vmatpush2.bf16.msra.mxu0 %v764
        %844 = vmatprep.mubr.bf16.mxu0 %v417
        %845 = vmatmul.mubr.bf16.gmra.mxu0 %v416
        %v846 = vpop.f32.mrf.mxu0
        %v847 = vadd.f32 %v642, %v846
        %v848 = vpop.f32.mrf.mxu0
        %v849 = vadd.f32 %v644, %v848
        %v850 = vpop.f32.mrf.mxu0
        %v851 = vadd.f32 %v646, %v850
        %v852 = vpop.f32.mrf.mxu0
        %v853 = vadd.f32 %v648, %v852
        %854 = vdwg.mxu0
        %v855 = vld [vmem:[#allocation2] sm:$0xee]
        %s856 = scalar_lea.vmem [#allocation6], 512
        %v857 = vld [vmem:[%s856] sm:$0xff]
        %v858 = vld [vmem:[%s856 + $0x8] sm:$0xff]
        %v859 = vld [vmem:[%s856 + $0x10] sm:$0xff]
        %v860 = vld [vmem:[%s856 + $0x18] sm:$0xff]
        %v861 = vld [vmem:[%s856 + $0x20] sm:$0xff]
        %v862 = vld [vmem:[%s856 + $0x28] sm:$0xff]
        %v863 = vld [vmem:[%s856 + $0x30] sm:$0xff]
        %v864 = vld [vmem:[%s856 + $0x38] sm:$0xff]
        %v865 = vld [vmem:[%s856 + $0x40] sm:$0xff]
        %v866 = vld [vmem:[%s856 + $0x48] sm:$0xff]
        %v867 = vld [vmem:[%s856 + $0x50] sm:$0xff]
        %v868 = vld [vmem:[%s856 + $0x58] sm:$0xff]
        %v869 = vld [vmem:[%s856 + $0x60] sm:$0xff]
        %v870 = vld [vmem:[%s856 + $0x68] sm:$0xff]
        %v871 = vld [vmem:[%s856 + $0x70] sm:$0xff]
        %v872 = vld [vmem:[%s856 + $0x78] sm:$0xff]
        %v873 = vld [vmem:[%s856 + $0x80] sm:$0xff]
        %v874 = vld [vmem:[%s856 + $0x88] sm:$0xff]
        %v875 = vld [vmem:[%s856 + $0x90] sm:$0xff]
        %v876 = vld [vmem:[%s856 + $0x98] sm:$0xff]
        %v877 = vld [vmem:[%s856 + $0xa0] sm:$0xff]
        %v878 = vld [vmem:[%s856 + $0xa8] sm:$0xff]
        %v879 = vld [vmem:[%s856 + $0xb0] sm:$0xff]
        %v880 = vld [vmem:[%s856 + $0xb8] sm:$0xff]
        %v881 = vld [vmem:[%s856 + $0xc0] sm:$0xff]
        %v882 = vld [vmem:[%s856 + $0xc8] sm:$0xff]
        %v883 = vld [vmem:[%s856 + $0xd0] sm:$0xff]
        %v884 = vld [vmem:[%s856 + $0xd8] sm:$0xff]
        %v885 = vld [vmem:[%s856 + $0xe0] sm:$0xff]
        %v886 = vld [vmem:[%s856 + $0xe8] sm:$0xff]
        %v887 = vld [vmem:[%s856 + $0xf0] sm:$0xff]
        %v888 = vld [vmem:[%s856 + $0xf8] sm:$0xff]
        %v890 = vunpack.c.l.b16 %v855
        %v891 = vunpack.c.h.b16 %v855
        %v892 = vpack.c.b16 %v412, %v890
        %v893 = vpack.c.b16 %v413, %v891
        %vm894 = vcmask 1046528
        %v895 = vrot.slane %v892, 1
        %v896 = vrot.slane %v418, 1
        %v897 = vsel %vm894, %v895, %v896
        %v898 = vrot.slane %v893, 1
        %v899 = vrot.slane %v419, 1
        %v900 = vsel %vm894, %v898, %v899
        %v935 = vunpack.c.l.b16 %v857
        %v936 = vunpack.c.h.b16 %v857
        %v937 = vunpack.c.l.b16 %v858
        %v938 = vunpack.c.h.b16 %v858
        %v939 = vunpack.c.l.b16 %v859
        %v940 = vunpack.c.h.b16 %v859
        %v941 = vunpack.c.l.b16 %v860
        %v942 = vunpack.c.h.b16 %v860
        %v943 = vunpack.c.l.b16 %v861
        %v944 = vunpack.c.h.b16 %v861
        %v945 = vunpack.c.l.b16 %v862
        %v946 = vunpack.c.h.b16 %v862
        %v947 = vunpack.c.l.b16 %v863
        %v948 = vunpack.c.h.b16 %v863
        %v949 = vunpack.c.l.b16 %v864
        %v950 = vunpack.c.h.b16 %v864
        %v951 = vunpack.c.l.b16 %v865
        %v952 = vunpack.c.h.b16 %v865
        %v953 = vunpack.c.l.b16 %v866
        %v954 = vunpack.c.h.b16 %v866
        %v955 = vunpack.c.l.b16 %v867
        %v956 = vunpack.c.h.b16 %v867
        %v957 = vunpack.c.l.b16 %v868
        %v958 = vunpack.c.h.b16 %v868
        %v959 = vunpack.c.l.b16 %v869
        %v960 = vunpack.c.h.b16 %v869
        %v961 = vunpack.c.l.b16 %v870
        %v962 = vunpack.c.h.b16 %v870
        %v963 = vunpack.c.l.b16 %v871
        %v964 = vunpack.c.h.b16 %v871
        %v965 = vunpack.c.l.b16 %v872
        %v966 = vunpack.c.h.b16 %v872
        %v967 = vunpack.c.l.b16 %v873
        %v968 = vunpack.c.h.b16 %v873
        %v969 = vunpack.c.l.b16 %v874
        %v970 = vunpack.c.h.b16 %v874
        %v971 = vunpack.c.l.b16 %v875
        %v972 = vunpack.c.h.b16 %v875
        %v973 = vunpack.c.l.b16 %v876
        %v974 = vunpack.c.h.b16 %v876
        %v975 = vunpack.c.l.b16 %v877
        %v976 = vunpack.c.h.b16 %v877
        %v977 = vunpack.c.l.b16 %v878
        %v978 = vunpack.c.h.b16 %v878
        %v979 = vunpack.c.l.b16 %v879
        %v980 = vunpack.c.h.b16 %v879
        %v981 = vunpack.c.l.b16 %v880
        %v982 = vunpack.c.h.b16 %v880
        %v983 = vunpack.c.l.b16 %v881
        %v984 = vunpack.c.h.b16 %v881
        %v985 = vunpack.c.l.b16 %v882
        %v986 = vunpack.c.h.b16 %v882
        %v987 = vunpack.c.l.b16 %v883
        %v988 = vunpack.c.h.b16 %v883
        %v989 = vunpack.c.l.b16 %v884
        %v990 = vunpack.c.h.b16 %v884
        %v991 = vunpack.c.l.b16 %v885
        %v992 = vunpack.c.h.b16 %v885
        %v993 = vunpack.c.l.b16 %v886
        %v994 = vunpack.c.h.b16 %v886
        %v995 = vunpack.c.l.b16 %v887
        %v996 = vunpack.c.h.b16 %v887
        %v997 = vunpack.c.l.b16 %v888
        %v998 = vunpack.c.h.b16 %v888
        %v999 = vpack.c.b16 %v937, %v935
        %v1000 = vpack.c.b16 %v938, %v936
        %v1001 = vpack.c.b16 %v941, %v939
        %v1002 = vpack.c.b16 %v942, %v940
        %v1003 = vpack.c.b16 %v945, %v943
        %v1004 = vpack.c.b16 %v946, %v944
        %v1005 = vpack.c.b16 %v949, %v947
        %v1006 = vpack.c.b16 %v950, %v948
        %v1007 = vpack.c.b16 %v953, %v951
        %v1008 = vpack.c.b16 %v954, %v952
        %v1009 = vpack.c.b16 %v957, %v955
        %v1010 = vpack.c.b16 %v958, %v956
        %v1011 = vpack.c.b16 %v961, %v959
        %v1012 = vpack.c.b16 %v962, %v960
        %v1013 = vpack.c.b16 %v965, %v963
        %v1014 = vpack.c.b16 %v966, %v964
        %v1015 = vpack.c.b16 %v969, %v967
        %v1016 = vpack.c.b16 %v970, %v968
        %v1017 = vpack.c.b16 %v973, %v971
        %v1018 = vpack.c.b16 %v974, %v972
        %v1019 = vpack.c.b16 %v977, %v975
        %v1020 = vpack.c.b16 %v978, %v976
        %v1021 = vpack.c.b16 %v981, %v979
        %v1022 = vpack.c.b16 %v982, %v980
        %v1023 = vpack.c.b16 %v985, %v983
        %v1024 = vpack.c.b16 %v986, %v984
        %v1025 = vpack.c.b16 %v989, %v987
        %v1026 = vpack.c.b16 %v990, %v988
        %v1027 = vpack.c.b16 %v993, %v991
        %v1028 = vpack.c.b16 %v994, %v992
        %v1029 = vpack.c.b16 %v997, %v995
        %v1030 = vpack.c.b16 %v998, %v996
        %1063 = vmatprep.subr.bf16.mxu0 %v1014
        %1064 = vmatpush1.bf16.msra.mxu0 %v1013
        %1065 = vmatprep.subr.bf16.mxu0 %v1012
        %1066 = vmatpush1.bf16.msra.mxu0 %v1011
        %1067 = vmatprep.subr.bf16.mxu0 %v1010
        %1068 = vmatpush1.bf16.msra.mxu0 %v1009
        %1069 = vmatprep.subr.bf16.mxu0 %v1008
        %1070 = vmatpush1.bf16.msra.mxu0 %v1007
        %1071 = vmatprep.subr.bf16.mxu0 %v1006
        %1072 = vmatpush1.bf16.msra.mxu0 %v1005
        %1073 = vmatprep.subr.bf16.mxu0 %v1004
        %1074 = vmatpush1.bf16.msra.mxu0 %v1003
        %1075 = vmatprep.subr.bf16.mxu0 %v1002
        %1076 = vmatpush1.bf16.msra.mxu0 %v1001
        %1077 = vmatprep.subr.bf16.mxu0 %v1000
        %1078 = vmatpush1.bf16.msra.mxu0 %v999
        %1079 = vmatprep.subr.bf16.mxu0 %v1030
        %1080 = vmatpush2.bf16.msra.mxu0 %v1029
        %1081 = vmatprep.subr.bf16.mxu0 %v1028
        %1082 = vmatpush2.bf16.msra.mxu0 %v1027
        %1083 = vmatprep.subr.bf16.mxu0 %v1026
        %1084 = vmatpush2.bf16.msra.mxu0 %v1025
        %1085 = vmatprep.subr.bf16.mxu0 %v1024
        %1086 = vmatpush2.bf16.msra.mxu0 %v1023
        %1087 = vmatprep.subr.bf16.mxu0 %v1022
        %1088 = vmatpush2.bf16.msra.mxu0 %v1021
        %1089 = vmatprep.subr.bf16.mxu0 %v1020
        %1090 = vmatpush2.bf16.msra.mxu0 %v1019
        %1091 = vmatprep.subr.bf16.mxu0 %v1018
        %1092 = vmatpush2.bf16.msra.mxu0 %v1017
        %1093 = vmatprep.subr.bf16.mxu0 %v1016
        %1094 = vmatpush2.bf16.msra.mxu0 %v1015
        %1095 = vmatprep.mubr.bf16.mxu0 %v900
        %1096 = vmatmul.mubr.bf16.gmra.mxu0 %v897
        %v1097 = vpop.f32.mrf.mxu0
        %v1098 = vadd.f32 0.0, %v1097
        %v1099 = vpop.f32.mrf.mxu0
        %v1100 = vadd.f32 0.0, %v1099
        %v1101 = vpop.f32.mrf.mxu0
        %v1102 = vadd.f32 0.0, %v1101
        %v1103 = vpop.f32.mrf.mxu0
        %v1104 = vadd.f32 0.0, %v1103
        %1105 = vdwg.mxu0
        %v1106 = vadd.f32 %v847, %v1098
        %v1107 = vadd.f32 %v849, %v1100
        %v1108 = vadd.f32 %v851, %v1102
        %v1109 = vadd.f32 %v853, %v1104
        %v1110 = vld [vmem:[%s2] sm:$0x3]
        %v1112 = vlaneseq
        %v1113 = vshrl.u32 %v1112, 7
        %v1114 = vsub.s32 0, %v1113
        %v1115 = vrot.slane %v1110, %v1114
        %v1116 = vlaneseq
        %v1117 = vshrl.u32 %v1116, 7
        %v1118 = vsub.s32 1, %v1117
        %v1119 = vrot.slane %v1110, %v1118
        %v1122 = vadd.f32 %v1106, %v1115
        %v1123 = vadd.f32 %v1107, %v1119
        %v1124 = vadd.f32 %v1108, %v1115
        %v1125 = vadd.f32 %v1109, %v1119
        %v1126 = vmax.f32 %v1122, 0.0
        %v1127 = vmax.f32 %v1123, 0.0
        %v1128 = vmax.f32 %v1124, 0.0
        %v1129 = vmax.f32 %v1125, 0.0
        %v1130 = vpack.c.bf16 %v1128, %v1126
        %v1131 = vpack.c.bf16 %v1129, %v1127
        %v1134 = vunpack.c.l.b16 %v1130
        %v1135 = vunpack.c.l.b16 %v1131
        %v1136 = vunpack.c.h.b16 %v1130
        %v1137 = vunpack.c.h.b16 %v1131
        %v1138 = vpack.c.b16 %v1135, %v1134
        %v1139 = vpack.c.b16 %v1137, %v1136
        %v1141 = vshrl.u32 %v1138, 16
        %v1143 = vrot.slane %v1141, 7
        %v1144 = vshll.u32 %v1138, 16
        %v1146 = vor.u32 %v1143, %v1144
        %v1147 = vrot.slane %v1143, 4
        %v1149 = vshrl.u32 %v1139, 16
        %v1151 = vrot.slane %v1149, 7
        %v1152 = vshll.u32 %v1139, 16
        %v1154 = vor.u32 %v1151, %v1152
        %v1155 = vsel %vm306, %v1147, %v1154
        %v1156 = vrot.slane %v1151, 4
        %v1160 = vsel %vm331, %v1146, %v339
        %1161 = vst [vmem:[#allocation2] sm:$0xff] %v1160
        %1162 = vst [vmem:[#allocation2 + $0x8] sm:$0xff] %v1155
        %v1163 = vld [vmem:[#allocation2 + $0x10] sm:$0x11]
        %v1164 = vsel %vm279, %v1156, %v1163
        %1165 = vst [vmem:[#allocation2 + $0x10] sm:$0x11] %v1164
        %v1166 = vld [vmem:[#allocation2] sm:$0xff]
        %v1167 = vld [vmem:[#allocation2 + $0x8] sm:$0xff]
        %v1168 = vld [vmem:[#allocation8] sm:$0xff]
        %v1169 = vld [vmem:[#allocation8 + $0x8] sm:$0xff]
        %v1170 = vld [vmem:[#allocation8 + $0x10] sm:$0xff]
        %v1171 = vld [vmem:[#allocation8 + $0x18] sm:$0xff]
        %v1172 = vld [vmem:[#allocation8 + $0x20] sm:$0xff]
        %v1173 = vld [vmem:[#allocation8 + $0x28] sm:$0xff]
        %v1174 = vld [vmem:[#allocation8 + $0x30] sm:$0xff]
        %v1175 = vld [vmem:[#allocation8 + $0x38] sm:$0xff]
        %v1176 = vld [vmem:[#allocation8 + $0x40] sm:$0xff]
        %v1177 = vld [vmem:[#allocation8 + $0x48] sm:$0xff]
        %v1178 = vld [vmem:[#allocation8 + $0x50] sm:$0xff]
        %v1179 = vld [vmem:[#allocation8 + $0x58] sm:$0xff]
        %v1180 = vld [vmem:[#allocation8 + $0x60] sm:$0xff]
        %v1181 = vld [vmem:[#allocation8 + $0x68] sm:$0xff]
        %v1182 = vld [vmem:[#allocation8 + $0x70] sm:$0xff]
        %v1183 = vld [vmem:[#allocation8 + $0x78] sm:$0xff]
        %v1184 = vld [vmem:[#allocation8 + $0x80] sm:$0xff]
        %v1185 = vld [vmem:[#allocation8 + $0x88] sm:$0xff]
        %v1186 = vld [vmem:[#allocation8 + $0x90] sm:$0xff]
        %v1187 = vld [vmem:[#allocation8 + $0x98] sm:$0xff]
        %v1188 = vld [vmem:[#allocation8 + $0xa0] sm:$0xff]
        %v1189 = vld [vmem:[#allocation8 + $0xa8] sm:$0xff]
        %v1190 = vld [vmem:[#allocation8 + $0xb0] sm:$0xff]
        %v1191 = vld [vmem:[#allocation8 + $0xb8] sm:$0xff]
        %v1192 = vld [vmem:[#allocation8 + $0xc0] sm:$0xff]
        %v1193 = vld [vmem:[#allocation8 + $0xc8] sm:$0xff]
        %v1194 = vld [vmem:[#allocation8 + $0xd0] sm:$0xff]
        %v1195 = vld [vmem:[#allocation8 + $0xd8] sm:$0xff]
        %v1196 = vld [vmem:[#allocation8 + $0xe0] sm:$0xff]
        %v1197 = vld [vmem:[#allocation8 + $0xe8] sm:$0xff]
        %v1198 = vld [vmem:[#allocation8 + $0xf0] sm:$0xff]
        %v1199 = vld [vmem:[#allocation8 + $0xf8] sm:$0xff]
        %v1200 = vld [vmem:[#allocation2 + $0x10] sm:$0x11]
        %s1201 = scalar_lea.vmem [#allocation8], 256
        %v1202 = vld [vmem:[%s1201] sm:$0xff]
        %v1203 = vld [vmem:[%s1201 + $0x8] sm:$0xff]
        %v1204 = vld [vmem:[%s1201 + $0x10] sm:$0xff]
        %v1205 = vld [vmem:[%s1201 + $0x18] sm:$0xff]
        %v1206 = vld [vmem:[%s1201 + $0x20] sm:$0xff]
        %v1207 = vld [vmem:[%s1201 + $0x28] sm:$0xff]
        %v1208 = vld [vmem:[%s1201 + $0x30] sm:$0xff]
        %v1209 = vld [vmem:[%s1201 + $0x38] sm:$0xff]
        %v1210 = vld [vmem:[%s1201 + $0x40] sm:$0xff]
        %v1211 = vld [vmem:[%s1201 + $0x48] sm:$0xff]
        %v1212 = vld [vmem:[%s1201 + $0x50] sm:$0xff]
        %v1213 = vld [vmem:[%s1201 + $0x58] sm:$0xff]
        %v1214 = vld [vmem:[%s1201 + $0x60] sm:$0xff]
        %v1215 = vld [vmem:[%s1201 + $0x68] sm:$0xff]
        %v1216 = vld [vmem:[%s1201 + $0x70] sm:$0xff]
        %v1217 = vld [vmem:[%s1201 + $0x78] sm:$0xff]
        %v1218 = vld [vmem:[%s1201 + $0x80] sm:$0xff]
        %v1219 = vld [vmem:[%s1201 + $0x88] sm:$0xff]
        %v1220 = vld [vmem:[%s1201 + $0x90] sm:$0xff]
        %v1221 = vld [vmem:[%s1201 + $0x98] sm:$0xff]
        %v1222 = vld [vmem:[%s1201 + $0xa0] sm:$0xff]
        %v1223 = vld [vmem:[%s1201 + $0xa8] sm:$0xff]
        %v1224 = vld [vmem:[%s1201 + $0xb0] sm:$0xff]
        %v1225 = vld [vmem:[%s1201 + $0xb8] sm:$0xff]
        %v1226 = vld [vmem:[%s1201 + $0xc0] sm:$0xff]
        %v1227 = vld [vmem:[%s1201 + $0xc8] sm:$0xff]
        %v1228 = vld [vmem:[%s1201 + $0xd0] sm:$0xff]
        %v1229 = vld [vmem:[%s1201 + $0xd8] sm:$0xff]
        %v1230 = vld [vmem:[%s1201 + $0xe0] sm:$0xff]
        %v1231 = vld [vmem:[%s1201 + $0xe8] sm:$0xff]
        %v1232 = vld [vmem:[%s1201 + $0xf0] sm:$0xff]
        %v1233 = vld [vmem:[%s1201 + $0xf8] sm:$0xff]
        %v1237 = vunpack.c.l.b16 %v1166
        %v1238 = vunpack.c.h.b16 %v1166
        %v1239 = vunpack.c.l.b16 %v1167
        %v1240 = vunpack.c.h.b16 %v1167
        %v1241 = vunpack.c.l.b16 %v1200
        %v1242 = vunpack.c.h.b16 %v1200
        %v1243 = vpack.c.b16 %v1239, %v1237
        %v1244 = vpack.c.b16 %v1240, %v1238
        %v1245 = vpack.c.b16 %v1241, %v1241
        %v1246 = vpack.c.b16 %v1242, %v1242
        %v1248 = vshrl.u32 %v1243, 16
        %v1250 = vshll.u32 %v1243, 16
        %v1252 = vrot.slane %v1250, 1
        %v1253 = vor.u32 %v1248, %v1252
        %v1255 = vshll.u32 %v1245, 16
        %v1257 = vrot.slane %v1255, 1
        %v1258 = vsel %vm420, %v1253, %v1257
        %v1260 = vshrl.u32 %v1244, 16
        %v1262 = vshll.u32 %v1244, 16
        %v1264 = vrot.slane %v1262, 1
        %v1265 = vor.u32 %v1260, %v1264
        %v1267 = vshll.u32 %v1246, 16
        %v1269 = vrot.slane %v1267, 1
        %v1270 = vsel %vm420, %v1265, %v1269
        %v1305 = vunpack.c.l.b16 %v1202
        %v1306 = vunpack.c.h.b16 %v1202
        %v1307 = vunpack.c.l.b16 %v1203
        %v1308 = vunpack.c.h.b16 %v1203
        %v1309 = vunpack.c.l.b16 %v1204
        %v1310 = vunpack.c.h.b16 %v1204
        %v1311 = vunpack.c.l.b16 %v1205
        %v1312 = vunpack.c.h.b16 %v1205
        %v1313 = vunpack.c.l.b16 %v1206
        %v1314 = vunpack.c.h.b16 %v1206
        %v1315 = vunpack.c.l.b16 %v1207
        %v1316 = vunpack.c.h.b16 %v1207
        %v1317 = vunpack.c.l.b16 %v1208
        %v1318 = vunpack.c.h.b16 %v1208
        %v1319 = vunpack.c.l.b16 %v1209
        %v1320 = vunpack.c.h.b16 %v1209
        %v1321 = vunpack.c.l.b16 %v1210
        %v1322 = vunpack.c.h.b16 %v1210
        %v1323 = vunpack.c.l.b16 %v1211
        %v1324 = vunpack.c.h.b16 %v1211
        %v1325 = vunpack.c.l.b16 %v1212
        %v1326 = vunpack.c.h.b16 %v1212
        %v1327 = vunpack.c.l.b16 %v1213
        %v1328 = vunpack.c.h.b16 %v1213
        %v1329 = vunpack.c.l.b16 %v1214
        %v1330 = vunpack.c.h.b16 %v1214
        %v1331 = vunpack.c.l.b16 %v1215
        %v1332 = vunpack.c.h.b16 %v1215
        %v1333 = vunpack.c.l.b16 %v1216
        %v1334 = vunpack.c.h.b16 %v1216
        %v1335 = vunpack.c.l.b16 %v1217
        %v1336 = vunpack.c.h.b16 %v1217
        %v1337 = vunpack.c.l.b16 %v1218
        %v1338 = vunpack.c.h.b16 %v1218
        %v1339 = vunpack.c.l.b16 %v1219
        %v1340 = vunpack.c.h.b16 %v1219
        %v1341 = vunpack.c.l.b16 %v1220
        %v1342 = vunpack.c.h.b16 %v1220
        %v1343 = vunpack.c.l.b16 %v1221
        %v1344 = vunpack.c.h.b16 %v1221
        %v1345 = vunpack.c.l.b16 %v1222
        %v1346 = vunpack.c.h.b16 %v1222
        %v1347 = vunpack.c.l.b16 %v1223
        %v1348 = vunpack.c.h.b16 %v1223
        %v1349 = vunpack.c.l.b16 %v1224
        %v1350 = vunpack.c.h.b16 %v1224
        %v1351 = vunpack.c.l.b16 %v1225
        %v1352 = vunpack.c.h.b16 %v1225
        %v1353 = vunpack.c.l.b16 %v1226
        %v1354 = vunpack.c.h.b16 %v1226
        %v1355 = vunpack.c.l.b16 %v1227
        %v1356 = vunpack.c.h.b16 %v1227
        %v1357 = vunpack.c.l.b16 %v1228
        %v1358 = vunpack.c.h.b16 %v1228
        %v1359 = vunpack.c.l.b16 %v1229
        %v1360 = vunpack.c.h.b16 %v1229
        %v1361 = vunpack.c.l.b16 %v1230
        %v1362 = vunpack.c.h.b16 %v1230
        %v1363 = vunpack.c.l.b16 %v1231
        %v1364 = vunpack.c.h.b16 %v1231
        %v1365 = vunpack.c.l.b16 %v1232
        %v1366 = vunpack.c.h.b16 %v1232
        %v1367 = vunpack.c.l.b16 %v1233
        %v1368 = vunpack.c.h.b16 %v1233
        %v1369 = vpack.c.b16 %v1307, %v1305
        %v1370 = vpack.c.b16 %v1308, %v1306
        %v1371 = vpack.c.b16 %v1311, %v1309
        %v1372 = vpack.c.b16 %v1312, %v1310
        %v1373 = vpack.c.b16 %v1315, %v1313
        %v1374 = vpack.c.b16 %v1316, %v1314
        %v1375 = vpack.c.b16 %v1319, %v1317
        %v1376 = vpack.c.b16 %v1320, %v1318
        %v1377 = vpack.c.b16 %v1323, %v1321
        %v1378 = vpack.c.b16 %v1324, %v1322
        %v1379 = vpack.c.b16 %v1327, %v1325
        %v1380 = vpack.c.b16 %v1328, %v1326
        %v1381 = vpack.c.b16 %v1331, %v1329
        %v1382 = vpack.c.b16 %v1332, %v1330
        %v1383 = vpack.c.b16 %v1335, %v1333
        %v1384 = vpack.c.b16 %v1336, %v1334
        %v1385 = vpack.c.b16 %v1339, %v1337
        %v1386 = vpack.c.b16 %v1340, %v1338
        %v1387 = vpack.c.b16 %v1343, %v1341
        %v1388 = vpack.c.b16 %v1344, %v1342
        %v1389 = vpack.c.b16 %v1347, %v1345
        %v1390 = vpack.c.b16 %v1348, %v1346
        %v1391 = vpack.c.b16 %v1351, %v1349
        %v1392 = vpack.c.b16 %v1352, %v1350
        %v1393 = vpack.c.b16 %v1355, %v1353
        %v1394 = vpack.c.b16 %v1356, %v1354
        %v1395 = vpack.c.b16 %v1359, %v1357
        %v1396 = vpack.c.b16 %v1360, %v1358
        %v1397 = vpack.c.b16 %v1363, %v1361
        %v1398 = vpack.c.b16 %v1364, %v1362
        %v1399 = vpack.c.b16 %v1367, %v1365
        %v1400 = vpack.c.b16 %v1368, %v1366
        %1433 = vmatprep.subr.bf16.mxu0 %v1384
        %1434 = vmatpush1.bf16.msra.mxu0 %v1383
        %1435 = vmatprep.subr.bf16.mxu0 %v1382
        %1436 = vmatpush1.bf16.msra.mxu0 %v1381
        %1437 = vmatprep.subr.bf16.mxu0 %v1380
        %1438 = vmatpush1.bf16.msra.mxu0 %v1379
        %1439 = vmatprep.subr.bf16.mxu0 %v1378
        %1440 = vmatpush1.bf16.msra.mxu0 %v1377
        %1441 = vmatprep.subr.bf16.mxu0 %v1376
        %1442 = vmatpush1.bf16.msra.mxu0 %v1375
        %1443 = vmatprep.subr.bf16.mxu0 %v1374
        %1444 = vmatpush1.bf16.msra.mxu0 %v1373
        %1445 = vmatprep.subr.bf16.mxu0 %v1372
        %1446 = vmatpush1.bf16.msra.mxu0 %v1371
        %1447 = vmatprep.subr.bf16.mxu0 %v1370
        %1448 = vmatpush1.bf16.msra.mxu0 %v1369
        %1449 = vmatprep.subr.bf16.mxu0 %v1400
        %1450 = vmatpush2.bf16.msra.mxu0 %v1399
        %1451 = vmatprep.subr.bf16.mxu0 %v1398
        %1452 = vmatpush2.bf16.msra.mxu0 %v1397
        %1453 = vmatprep.subr.bf16.mxu0 %v1396
        %1454 = vmatpush2.bf16.msra.mxu0 %v1395
        %1455 = vmatprep.subr.bf16.mxu0 %v1394
        %1456 = vmatpush2.bf16.msra.mxu0 %v1393
        %1457 = vmatprep.subr.bf16.mxu0 %v1392
        %1458 = vmatpush2.bf16.msra.mxu0 %v1391
        %1459 = vmatprep.subr.bf16.mxu0 %v1390
        %1460 = vmatpush2.bf16.msra.mxu0 %v1389
        %1461 = vmatprep.subr.bf16.mxu0 %v1388
        %1462 = vmatpush2.bf16.msra.mxu0 %v1387
        %1463 = vmatprep.subr.bf16.mxu0 %v1386
        %1464 = vmatpush2.bf16.msra.mxu0 %v1385
        %1465 = vmatprep.mubr.bf16.mxu0 %v1270
        %1466 = vmatmul.mubr.bf16.gmra.mxu0 %v1258
        %v1467 = vpop.f32.mrf.mxu0
        %v1468 = vadd.f32 0.0, %v1467
        %v1469 = vpop.f32.mrf.mxu0
        %v1470 = vadd.f32 0.0, %v1469
        %v1471 = vpop.f32.mrf.mxu0
        %v1472 = vadd.f32 0.0, %v1471
        %v1473 = vpop.f32.mrf.mxu0
        %v1474 = vadd.f32 0.0, %v1473
        %1475 = vdwg.mxu0
        %v1510 = vunpack.c.l.b16 %v1168
        %v1511 = vunpack.c.h.b16 %v1168
        %v1512 = vunpack.c.l.b16 %v1169
        %v1513 = vunpack.c.h.b16 %v1169
        %v1514 = vunpack.c.l.b16 %v1170
        %v1515 = vunpack.c.h.b16 %v1170
        %v1516 = vunpack.c.l.b16 %v1171
        %v1517 = vunpack.c.h.b16 %v1171
        %v1518 = vunpack.c.l.b16 %v1172
        %v1519 = vunpack.c.h.b16 %v1172
        %v1520 = vunpack.c.l.b16 %v1173
        %v1521 = vunpack.c.h.b16 %v1173
        %v1522 = vunpack.c.l.b16 %v1174
        %v1523 = vunpack.c.h.b16 %v1174
        %v1524 = vunpack.c.l.b16 %v1175
        %v1525 = vunpack.c.h.b16 %v1175
        %v1526 = vunpack.c.l.b16 %v1176
        %v1527 = vunpack.c.h.b16 %v1176
        %v1528 = vunpack.c.l.b16 %v1177
        %v1529 = vunpack.c.h.b16 %v1177
        %v1530 = vunpack.c.l.b16 %v1178
        %v1531 = vunpack.c.h.b16 %v1178
        %v1532 = vunpack.c.l.b16 %v1179
        %v1533 = vunpack.c.h.b16 %v1179
        %v1534 = vunpack.c.l.b16 %v1180
        %v1535 = vunpack.c.h.b16 %v1180
        %v1536 = vunpack.c.l.b16 %v1181
        %v1537 = vunpack.c.h.b16 %v1181
        %v1538 = vunpack.c.l.b16 %v1182
        %v1539 = vunpack.c.h.b16 %v1182
        %v1540 = vunpack.c.l.b16 %v1183
        %v1541 = vunpack.c.h.b16 %v1183
        %v1542 = vunpack.c.l.b16 %v1184
        %v1543 = vunpack.c.h.b16 %v1184
        %v1544 = vunpack.c.l.b16 %v1185
        %v1545 = vunpack.c.h.b16 %v1185
        %v1546 = vunpack.c.l.b16 %v1186
        %v1547 = vunpack.c.h.b16 %v1186
        %v1548 = vunpack.c.l.b16 %v1187
        %v1549 = vunpack.c.h.b16 %v1187
        %v1550 = vunpack.c.l.b16 %v1188
        %v1551 = vunpack.c.h.b16 %v1188
        %v1552 = vunpack.c.l.b16 %v1189
        %v1553 = vunpack.c.h.b16 %v1189
        %v1554 = vunpack.c.l.b16 %v1190
        %v1555 = vunpack.c.h.b16 %v1190
        %v1556 = vunpack.c.l.b16 %v1191
        %v1557 = vunpack.c.h.b16 %v1191
        %v1558 = vunpack.c.l.b16 %v1192
        %v1559 = vunpack.c.h.b16 %v1192
        %v1560 = vunpack.c.l.b16 %v1193
        %v1561 = vunpack.c.h.b16 %v1193
        %v1562 = vunpack.c.l.b16 %v1194
        %v1563 = vunpack.c.h.b16 %v1194
        %v1564 = vunpack.c.l.b16 %v1195
        %v1565 = vunpack.c.h.b16 %v1195
        %v1566 = vunpack.c.l.b16 %v1196
        %v1567 = vunpack.c.h.b16 %v1196
        %v1568 = vunpack.c.l.b16 %v1197
        %v1569 = vunpack.c.h.b16 %v1197
        %v1570 = vunpack.c.l.b16 %v1198
        %v1571 = vunpack.c.h.b16 %v1198
        %v1572 = vunpack.c.l.b16 %v1199
        %v1573 = vunpack.c.h.b16 %v1199
        %v1574 = vpack.c.b16 %v1512, %v1510
        %v1575 = vpack.c.b16 %v1513, %v1511
        %v1576 = vpack.c.b16 %v1516, %v1514
        %v1577 = vpack.c.b16 %v1517, %v1515
        %v1578 = vpack.c.b16 %v1520, %v1518
        %v1579 = vpack.c.b16 %v1521, %v1519
        %v1580 = vpack.c.b16 %v1524, %v1522
        %v1581 = vpack.c.b16 %v1525, %v1523
        %v1582 = vpack.c.b16 %v1528, %v1526
        %v1583 = vpack.c.b16 %v1529, %v1527
        %v1584 = vpack.c.b16 %v1532, %v1530
        %v1585 = vpack.c.b16 %v1533, %v1531
        %v1586 = vpack.c.b16 %v1536, %v1534
        %v1587 = vpack.c.b16 %v1537, %v1535
        %v1588 = vpack.c.b16 %v1540, %v1538
        %v1589 = vpack.c.b16 %v1541, %v1539
        %v1590 = vpack.c.b16 %v1544, %v1542
        %v1591 = vpack.c.b16 %v1545, %v1543
        %v1592 = vpack.c.b16 %v1548, %v1546
        %v1593 = vpack.c.b16 %v1549, %v1547
        %v1594 = vpack.c.b16 %v1552, %v1550
        %v1595 = vpack.c.b16 %v1553, %v1551
        %v1596 = vpack.c.b16 %v1556, %v1554
        %v1597 = vpack.c.b16 %v1557, %v1555
        %v1598 = vpack.c.b16 %v1560, %v1558
        %v1599 = vpack.c.b16 %v1561, %v1559
        %v1600 = vpack.c.b16 %v1564, %v1562
        %v1601 = vpack.c.b16 %v1565, %v1563
        %v1602 = vpack.c.b16 %v1568, %v1566
        %v1603 = vpack.c.b16 %v1569, %v1567
        %v1604 = vpack.c.b16 %v1572, %v1570
        %v1605 = vpack.c.b16 %v1573, %v1571
        %1638 = vmatprep.subr.bf16.mxu0 %v1589
        %1639 = vmatpush1.bf16.msra.mxu0 %v1588
        %1640 = vmatprep.subr.bf16.mxu0 %v1587
        %1641 = vmatpush1.bf16.msra.mxu0 %v1586
        %1642 = vmatprep.subr.bf16.mxu0 %v1585
        %1643 = vmatpush1.bf16.msra.mxu0 %v1584
        %1644 = vmatprep.subr.bf16.mxu0 %v1583
        %1645 = vmatpush1.bf16.msra.mxu0 %v1582
        %1646 = vmatprep.subr.bf16.mxu0 %v1581
        %1647 = vmatpush1.bf16.msra.mxu0 %v1580
        %1648 = vmatprep.subr.bf16.mxu0 %v1579
        %1649 = vmatpush1.bf16.msra.mxu0 %v1578
        %1650 = vmatprep.subr.bf16.mxu0 %v1577
        %1651 = vmatpush1.bf16.msra.mxu0 %v1576
        %1652 = vmatprep.subr.bf16.mxu0 %v1575
        %1653 = vmatpush1.bf16.msra.mxu0 %v1574
        %1654 = vmatprep.subr.bf16.mxu0 %v1605
        %1655 = vmatpush2.bf16.msra.mxu0 %v1604
        %1656 = vmatprep.subr.bf16.mxu0 %v1603
        %1657 = vmatpush2.bf16.msra.mxu0 %v1602
        %1658 = vmatprep.subr.bf16.mxu0 %v1601
        %1659 = vmatpush2.bf16.msra.mxu0 %v1600
        %1660 = vmatprep.subr.bf16.mxu0 %v1599
        %1661 = vmatpush2.bf16.msra.mxu0 %v1598
        %1662 = vmatprep.subr.bf16.mxu0 %v1597
        %1663 = vmatpush2.bf16.msra.mxu0 %v1596
        %1664 = vmatprep.subr.bf16.mxu0 %v1595
        %1665 = vmatpush2.bf16.msra.mxu0 %v1594
        %1666 = vmatprep.subr.bf16.mxu0 %v1593
        %1667 = vmatpush2.bf16.msra.mxu0 %v1592
        %1668 = vmatprep.subr.bf16.mxu0 %v1591
        %1669 = vmatpush2.bf16.msra.mxu0 %v1590
        %1670 = vmatprep.mubr.bf16.mxu0 %v1244
        %1671 = vmatmul.mubr.bf16.gmra.mxu0 %v1243
        %v1672 = vpop.f32.mrf.mxu0
        %v1673 = vadd.f32 %v1468, %v1672
        %v1674 = vpop.f32.mrf.mxu0
        %v1675 = vadd.f32 %v1470, %v1674
        %v1676 = vpop.f32.mrf.mxu0
        %v1677 = vadd.f32 %v1472, %v1676
        %v1678 = vpop.f32.mrf.mxu0
        %v1679 = vadd.f32 %v1474, %v1678
        %1680 = vdwg.mxu0
        %v1681 = vld [vmem:[#allocation2] sm:$0xee]
        %s1682 = scalar_lea.vmem [#allocation8], 512
        %v1683 = vld [vmem:[%s1682] sm:$0xff]
        %v1684 = vld [vmem:[%s1682 + $0x8] sm:$0xff]
        %v1685 = vld [vmem:[%s1682 + $0x10] sm:$0xff]
        %v1686 = vld [vmem:[%s1682 + $0x18] sm:$0xff]
        %v1687 = vld [vmem:[%s1682 + $0x20] sm:$0xff]
        %v1688 = vld [vmem:[%s1682 + $0x28] sm:$0xff]
        %v1689 = vld [vmem:[%s1682 + $0x30] sm:$0xff]
        %v1690 = vld [vmem:[%s1682 + $0x38] sm:$0xff]
        %v1691 = vld [vmem:[%s1682 + $0x40] sm:$0xff]
        %v1692 = vld [vmem:[%s1682 + $0x48] sm:$0xff]
        %v1693 = vld [vmem:[%s1682 + $0x50] sm:$0xff]
        %v1694 = vld [vmem:[%s1682 + $0x58] sm:$0xff]
        %v1695 = vld [vmem:[%s1682 + $0x60] sm:$0xff]
        %v1696 = vld [vmem:[%s1682 + $0x68] sm:$0xff]
        %v1697 = vld [vmem:[%s1682 + $0x70] sm:$0xff]
        %v1698 = vld [vmem:[%s1682 + $0x78] sm:$0xff]
        %v1699 = vld [vmem:[%s1682 + $0x80] sm:$0xff]
        %v1700 = vld [vmem:[%s1682 + $0x88] sm:$0xff]
        %v1701 = vld [vmem:[%s1682 + $0x90] sm:$0xff]
        %v1702 = vld [vmem:[%s1682 + $0x98] sm:$0xff]
        %v1703 = vld [vmem:[%s1682 + $0xa0] sm:$0xff]
        %v1704 = vld [vmem:[%s1682 + $0xa8] sm:$0xff]
        %v1705 = vld [vmem:[%s1682 + $0xb0] sm:$0xff]
        %v1706 = vld [vmem:[%s1682 + $0xb8] sm:$0xff]
        %v1707 = vld [vmem:[%s1682 + $0xc0] sm:$0xff]
        %v1708 = vld [vmem:[%s1682 + $0xc8] sm:$0xff]
        %v1709 = vld [vmem:[%s1682 + $0xd0] sm:$0xff]
        %v1710 = vld [vmem:[%s1682 + $0xd8] sm:$0xff]
        %v1711 = vld [vmem:[%s1682 + $0xe0] sm:$0xff]
        %v1712 = vld [vmem:[%s1682 + $0xe8] sm:$0xff]
        %v1713 = vld [vmem:[%s1682 + $0xf0] sm:$0xff]
        %v1714 = vld [vmem:[%s1682 + $0xf8] sm:$0xff]
        %v1716 = vunpack.c.l.b16 %v1681
        %v1717 = vunpack.c.h.b16 %v1681
        %v1718 = vpack.c.b16 %v1239, %v1716
        %v1719 = vpack.c.b16 %v1240, %v1717
        %v1720 = vrot.slane %v1718, 1
        %v1721 = vrot.slane %v1245, 1
        %v1722 = vsel %vm894, %v1720, %v1721
        %v1723 = vrot.slane %v1719, 1
        %v1724 = vrot.slane %v1246, 1
        %v1725 = vsel %vm894, %v1723, %v1724
        %v1760 = vunpack.c.l.b16 %v1683
        %v1761 = vunpack.c.h.b16 %v1683
        %v1762 = vunpack.c.l.b16 %v1684
        %v1763 = vunpack.c.h.b16 %v1684
        %v1764 = vunpack.c.l.b16 %v1685
        %v1765 = vunpack.c.h.b16 %v1685
        %v1766 = vunpack.c.l.b16 %v1686
        %v1767 = vunpack.c.h.b16 %v1686
        %v1768 = vunpack.c.l.b16 %v1687
        %v1769 = vunpack.c.h.b16 %v1687
        %v1770 = vunpack.c.l.b16 %v1688
        %v1771 = vunpack.c.h.b16 %v1688
        %v1772 = vunpack.c.l.b16 %v1689
        %v1773 = vunpack.c.h.b16 %v1689
        %v1774 = vunpack.c.l.b16 %v1690
        %v1775 = vunpack.c.h.b16 %v1690
        %v1776 = vunpack.c.l.b16 %v1691
        %v1777 = vunpack.c.h.b16 %v1691
        %v1778 = vunpack.c.l.b16 %v1692
        %v1779 = vunpack.c.h.b16 %v1692
        %v1780 = vunpack.c.l.b16 %v1693
        %v1781 = vunpack.c.h.b16 %v1693
        %v1782 = vunpack.c.l.b16 %v1694
        %v1783 = vunpack.c.h.b16 %v1694
        %v1784 = vunpack.c.l.b16 %v1695
        %v1785 = vunpack.c.h.b16 %v1695
        %v1786 = vunpack.c.l.b16 %v1696
        %v1787 = vunpack.c.h.b16 %v1696
        %v1788 = vunpack.c.l.b16 %v1697
        %v1789 = vunpack.c.h.b16 %v1697
        %v1790 = vunpack.c.l.b16 %v1698
        %v1791 = vunpack.c.h.b16 %v1698
        %v1792 = vunpack.c.l.b16 %v1699
        %v1793 = vunpack.c.h.b16 %v1699
        %v1794 = vunpack.c.l.b16 %v1700
        %v1795 = vunpack.c.h.b16 %v1700
        %v1796 = vunpack.c.l.b16 %v1701
        %v1797 = vunpack.c.h.b16 %v1701
        %v1798 = vunpack.c.l.b16 %v1702
        %v1799 = vunpack.c.h.b16 %v1702
        %v1800 = vunpack.c.l.b16 %v1703
        %v1801 = vunpack.c.h.b16 %v1703
        %v1802 = vunpack.c.l.b16 %v1704
        %v1803 = vunpack.c.h.b16 %v1704
        %v1804 = vunpack.c.l.b16 %v1705
        %v1805 = vunpack.c.h.b16 %v1705
        %v1806 = vunpack.c.l.b16 %v1706
        %v1807 = vunpack.c.h.b16 %v1706
        %v1808 = vunpack.c.l.b16 %v1707
        %v1809 = vunpack.c.h.b16 %v1707
        %v1810 = vunpack.c.l.b16 %v1708
        %v1811 = vunpack.c.h.b16 %v1708
        %v1812 = vunpack.c.l.b16 %v1709
        %v1813 = vunpack.c.h.b16 %v1709
        %v1814 = vunpack.c.l.b16 %v1710
        %v1815 = vunpack.c.h.b16 %v1710
        %v1816 = vunpack.c.l.b16 %v1711
        %v1817 = vunpack.c.h.b16 %v1711
        %v1818 = vunpack.c.l.b16 %v1712
        %v1819 = vunpack.c.h.b16 %v1712
        %v1820 = vunpack.c.l.b16 %v1713
        %v1821 = vunpack.c.h.b16 %v1713
        %v1822 = vunpack.c.l.b16 %v1714
        %v1823 = vunpack.c.h.b16 %v1714
        %v1824 = vpack.c.b16 %v1762, %v1760
        %v1825 = vpack.c.b16 %v1763, %v1761
        %v1826 = vpack.c.b16 %v1766, %v1764
        %v1827 = vpack.c.b16 %v1767, %v1765
        %v1828 = vpack.c.b16 %v1770, %v1768
        %v1829 = vpack.c.b16 %v1771, %v1769
        %v1830 = vpack.c.b16 %v1774, %v1772
        %v1831 = vpack.c.b16 %v1775, %v1773
        %v1832 = vpack.c.b16 %v1778, %v1776
        %v1833 = vpack.c.b16 %v1779, %v1777
        %v1834 = vpack.c.b16 %v1782, %v1780
        %v1835 = vpack.c.b16 %v1783, %v1781
        %v1836 = vpack.c.b16 %v1786, %v1784
        %v1837 = vpack.c.b16 %v1787, %v1785
        %v1838 = vpack.c.b16 %v1790, %v1788
        %v1839 = vpack.c.b16 %v1791, %v1789
        %v1840 = vpack.c.b16 %v1794, %v1792
        %v1841 = vpack.c.b16 %v1795, %v1793
        %v1842 = vpack.c.b16 %v1798, %v1796
        %v1843 = vpack.c.b16 %v1799, %v1797
        %v1844 = vpack.c.b16 %v1802, %v1800
        %v1845 = vpack.c.b16 %v1803, %v1801
        %v1846 = vpack.c.b16 %v1806, %v1804
        %v1847 = vpack.c.b16 %v1807, %v1805
        %v1848 = vpack.c.b16 %v1810, %v1808
        %v1849 = vpack.c.b16 %v1811, %v1809
        %v1850 = vpack.c.b16 %v1814, %v1812
        %v1851 = vpack.c.b16 %v1815, %v1813
        %v1852 = vpack.c.b16 %v1818, %v1816
        %v1853 = vpack.c.b16 %v1819, %v1817
        %v1854 = vpack.c.b16 %v1822, %v1820
        %v1855 = vpack.c.b16 %v1823, %v1821
        %1888 = vmatprep.subr.bf16.mxu0 %v1839
        %1889 = vmatpush1.bf16.msra.mxu0 %v1838
        %1890 = vmatprep.subr.bf16.mxu0 %v1837
        %1891 = vmatpush1.bf16.msra.mxu0 %v1836
        %1892 = vmatprep.subr.bf16.mxu0 %v1835
        %1893 = vmatpush1.bf16.msra.mxu0 %v1834
        %1894 = vmatprep.subr.bf16.mxu0 %v1833
        %1895 = vmatpush1.bf16.msra.mxu0 %v1832
        %1896 = vmatprep.subr.bf16.mxu0 %v1831
        %1897 = vmatpush1.bf16.msra.mxu0 %v1830
        %1898 = vmatprep.subr.bf16.mxu0 %v1829
        %1899 = vmatpush1.bf16.msra.mxu0 %v1828
        %1900 = vmatprep.subr.bf16.mxu0 %v1827
        %1901 = vmatpush1.bf16.msra.mxu0 %v1826
        %1902 = vmatprep.subr.bf16.mxu0 %v1825
        %1903 = vmatpush1.bf16.msra.mxu0 %v1824
        %1904 = vmatprep.subr.bf16.mxu0 %v1855
        %1905 = vmatpush2.bf16.msra.mxu0 %v1854
        %1906 = vmatprep.subr.bf16.mxu0 %v1853
        %1907 = vmatpush2.bf16.msra.mxu0 %v1852
        %1908 = vmatprep.subr.bf16.mxu0 %v1851
        %1909 = vmatpush2.bf16.msra.mxu0 %v1850
        %1910 = vmatprep.subr.bf16.mxu0 %v1849
        %1911 = vmatpush2.bf16.msra.mxu0 %v1848
        %1912 = vmatprep.subr.bf16.mxu0 %v1847
        %1913 = vmatpush2.bf16.msra.mxu0 %v1846
        %1914 = vmatprep.subr.bf16.mxu0 %v1845
        %1915 = vmatpush2.bf16.msra.mxu0 %v1844
        %1916 = vmatprep.subr.bf16.mxu0 %v1843
        %1917 = vmatpush2.bf16.msra.mxu0 %v1842
        %1918 = vmatprep.subr.bf16.mxu0 %v1841
        %1919 = vmatpush2.bf16.msra.mxu0 %v1840
        %1920 = vmatprep.mubr.bf16.mxu0 %v1725
        %1921 = vmatmul.mubr.bf16.gmra.mxu0 %v1722
        %v1922 = vpop.f32.mrf.mxu0
        %v1923 = vadd.f32 0.0, %v1922
        %v1924 = vpop.f32.mrf.mxu0
        %v1925 = vadd.f32 0.0, %v1924
        %v1926 = vpop.f32.mrf.mxu0
        %v1927 = vadd.f32 0.0, %v1926
        %v1928 = vpop.f32.mrf.mxu0
        %v1929 = vadd.f32 0.0, %v1928
        %1930 = vdwg.mxu0
        %v1931 = vadd.f32 %v1673, %v1923
        %v1932 = vadd.f32 %v1675, %v1925
        %v1933 = vadd.f32 %v1677, %v1927
        %v1934 = vadd.f32 %v1679, %v1929
        %v1935 = vld [vmem:[%s4] sm:$0x3]
        %v1937 = vlaneseq
        %v1938 = vshrl.u32 %v1937, 7
        %v1939 = vsub.s32 0, %v1938
        %v1940 = vrot.slane %v1935, %v1939
        %v1941 = vlaneseq
        %v1942 = vshrl.u32 %v1941, 7
        %v1943 = vsub.s32 1, %v1942
        %v1944 = vrot.slane %v1935, %v1943
        %v1947 = vadd.f32 %v1931, %v1940
        %v1948 = vadd.f32 %v1932, %v1944
        %v1949 = vadd.f32 %v1933, %v1940
        %v1950 = vadd.f32 %v1934, %v1944
        %v1951 = vadd.f32 %v291, %v1947
        %v1952 = vadd.f32 %v292, %v1948
        %v1953 = vadd.f32 %v293, %v1949
        %v1954 = vadd.f32 %v294, %v1950
        %1955 = vst [vmem:[%s271] sm:$0xff] %v1951
        %1956 = vst [vmem:[%s271 + $0x8] sm:$0xff] %v1952
        %1957 = vst [vmem:[%s271 + $0x10] sm:$0xff] %v1953
        %1958 = vst [vmem:[%s271 + $0x18] sm:$0xff] %v1954
        %s1959 = sand.u32 %s141, 1
        %s1960 = scalar_lea.sflag [#allocation5], %s1959
        %s1961 = sand.u32 %s141, 1
        %s1962 = smul.addr %s1961, 32
        %s1963 = scalar_lea.vmem [#allocation9], %s1962
        // Predicated region
        $region53: #{tpu_custom_call.1} parent=39 // pred_check
          %p1964 = pneg %p151
        $region54: #{tpu_custom_call.1} parent=39 // pred_check_branch
          %1966 = sbr.rel (%p1964) target = $region56
        $region55: #{tpu_custom_call.1} parent=39 // pred_region
          %s1968 = ssub.s32 512, 512
          %1969 = vsyncadd %s1960, %s1968
          %s1970 = smul.addr %s23, 4
          %s1971 = smul.addr %s1970, 128
          %s1972 = scalar_lea.hbm %s5, %s1971
          %s1973 = sshll.u32 %s1963, 4
          %s1974 = int_to_ptr.vmem [resolvable:$true] %s1973
          %1979 = dma.vmem_to_hbm [thread:$0]  %s1974, 512, %s1972, %s1960, 256, 256, 16
        $region56: #{tpu_custom_call.1} parent=39 // pred_fallthru
          _
      $region40: #{tpu_custom_call.1} parent=5 // pred_fallthru
        _
      %p1980 = scmp.le.s32.totalorder 2, %s18
      // Predicated region
      $region57: #{tpu_custom_call.1} parent=5 // pred_check
        %p1981 = pneg %p1980
      $region58: #{tpu_custom_call.1} parent=5 // pred_check_branch
        %1983 = sbr.rel (%p1981) target = $region60
      $region59: #{tpu_custom_call.1} parent=5 // pred_region
        %s1984 = ssub.s32 %s18, 2
        // Predicated region
        $region61: #{tpu_custom_call.1} parent=59 // pred_check
          %p1985 = pneg %p157
        $region62: #{tpu_custom_call.1} parent=59 // pred_check_branch
          %1987 = sbr.rel (%p1985) target = $region64
        $region63: #{tpu_custom_call.1} parent=59 // pred_region
          %s1988 = sand.u32 %s142, 1
          %s1989 = scalar_lea.sflag [#allocation5], %s1988
          %s1990 = sand.u32 %s142, 1
          %s1991 = smul.addr %s1990, 32
          %s1992 = scalar_lea.vmem [#allocation9], %s1991
          %1993 = dma.done %s1989, 512
        $region64: #{tpu_custom_call.1} parent=59 // pred_fallthru
          _
      $region60: #{tpu_custom_call.1} parent=5 // pred_fallthru
        _
    $region6: #{tpu_custom_call.1} parent=1 // loop_footer
      %s22 = sadd.s32 1, %s18
    $region7: #{tpu_custom_call.1} parent=1 // loop_footer_branch
      %17 = sbr.rel target = $region3
    $region8: #{tpu_custom_call.1} parent=1 // loop_exit
      _
    %1994 = vsyncpa [#allocation4], 1
    %s1995 = scalar_lea.sflag [#allocation4], 1
    %1996 = vsyncpa %s1995, 1
    %1997 = vsyncpa [#allocation7], 1
    %1998 = vsyncpa [#allocation5], 1
    %s1999 = scalar_lea.sflag [#allocation5], 1
    %2000 = vsyncpa %s1999, 1

</llo_original>
